<compile_context>
chip_gen: v7x
topology: tpu7x:2x2x1
jax: 0.10.0
libtpu: 0.0.40
codegen_flags: <defaults>
</compile_context>

<pallas_src>
import math

import numpy as np
import jax
import jax.numpy as jnp
from jax import lax
from jax.experimental import pallas as pl
from jax.experimental.pallas import tpu as pltpu

BN_EPS = 1e-5
_LANE = 128
_SUBLANE = 8
_MAX_BATCH_TILE = 512  # rows per grid step when the batch gets large


def _round_up(n, m):
    return ((n + m - 1) // m) * m


def _elu(v):
    # Overflowing exp(v) for large positive v lands in the discarded select
    # lane (forward-only), so no jnp.minimum clamp is needed.
    return jnp.where(v > 0, v, jnp.exp(v) - 1.0)


def _mlp_kernel_factory(n_mid):
    """Kernel refs: x, w0, b0, wmid(stacked), bmid(stacked), wlast, blast, out."""

    def kernel(x_ref, w0_ref, b0_ref, wmid_ref, bmid_ref, wlast_ref, blast_ref,
               out_ref):
        # First linear (eval BatchNorm already folded into w0/b0 when it
        # applies).  x arrives bf16; f32 accumulate on the MXU.
        h = jnp.dot(x_ref[...], w0_ref[...],
                    preferred_element_type=jnp.float32)
        h = _elu(h + b0_ref[...]).astype(jnp.bfloat16)

        if n_mid > 0:
            def body(i, carry):
                acc = jnp.dot(carry, wmid_ref[i],
                              preferred_element_type=jnp.float32)
                return _elu(acc + bmid_ref[i]).astype(jnp.bfloat16)

            h = lax.fori_loop(0, n_mid, body, h, unroll=True)

        # Final linear, no activation.  Dropout (eval) is the identity.
        out = jnp.dot(h, wlast_ref[...],
                      preferred_element_type=jnp.float32) + blast_ref[...]
        out_ref[...] = out.astype(out_ref.dtype)

    return kernel


def prepare_params(params):
    """One-time packing: BN fold, zero lane padding, bf16 weights, stacked middles."""
    weights = [jnp.asarray(w, jnp.float32) for w in params["weights"]]
    biases = [jnp.asarray(b, jnp.float32) for b in params["biases"]]
    in_dim = weights[0].shape[0]
    width = weights[0].shape[1]
    out_dim = weights[-1].shape[1]

    w_pad = _round_up(width, _LANE)

    def pad_cols(a, cols):          # zero padding only (pad lanes must stay 0)
        return jnp.pad(a, ((0, 0), (0, cols - a.shape[1])))

    def pad_rows(a, rows):
        return jnp.pad(a, ((0, rows - a.shape[0]), (0, 0)))

    def pad_bias(b, cols):
        return jnp.pad(b, (0, cols - b.shape[0])).reshape(1, cols)

    # Fold eval-mode BatchNorm1d into the first Linear:
    #   y = ((x - mean) * rsqrt(var+eps) * gamma + beta) @ W0 + b0
    #     = x @ (diag(scale) @ W0) + (shift @ W0 + b0)
    scale = params["gamma"] * jax.lax.rsqrt(params["running_var"] + BN_EPS)
    shift = params["beta"] - params["running_mean"] * scale
    w0, b0 = weights[0], biases[0]
    w0_bn = scale[:, None] * w0
    b0_bn = b0 + shift @ w0

    mids_w = weights[1:-1]
    mids_b = biases[1:-1]
    n_mid = len(mids_w)
    if n_mid > 0:
        wmid = jnp.stack(
            [pad_rows(pad_cols(w, w_pad), w_pad) for w in mids_w]
        ).astype(jnp.bfloat16)
        bmid = jnp.stack([pad_bias(b, w_pad) for b in mids_b]).astype(
            jnp.float32)
    else:
        wmid = jnp.zeros((1, w_pad, w_pad), jnp.bfloat16)
        bmid = jnp.zeros((1, 1, w_pad), jnp.float32)

    return {
        "in_dim": in_dim,
        "out_dim": out_dim,
        "n_mid": n_mid,
        "w_pad": w_pad,
        # first layer kept at (in_dim, w_pad): feature dim handled full-extent
        "w0_bn": pad_cols(w0_bn, w_pad).astype(jnp.bfloat16),
        "b0_bn": pad_bias(b0_bn, w_pad).astype(jnp.float32),
        "w0_raw": pad_cols(w0, w_pad).astype(jnp.bfloat16),
        "b0_raw": pad_bias(b0, w_pad).astype(jnp.float32),
        "wmid": wmid,
        "bmid": bmid,
        # last layer: rows padded to w_pad, columns kept at the true out_dim
        "wlast": pad_rows(weights[-1], w_pad).astype(jnp.bfloat16),
        "blast": biases[-1].reshape(1, out_dim).astype(jnp.float32),
    }


def mlp_regressor_forward(x, packed):
    """Pallas forward pass for MLPRegressor (inference)."""
    batch, in_dim = x.shape
    assert in_dim == packed["in_dim"]

    # forward() uses seqmodel[1:] (skip BatchNorm) when batch size == 1.
    # NOTE: resolved from the static shape; a traced batch dim would pick one
    # branch at trace time.
    apply_bn = batch != 1
    w0 = packed["w0_bn"] if apply_bn else packed["w0_raw"]
    b0 = packed["b0_bn"] if apply_bn else packed["b0_raw"]

    w_pad = packed["w_pad"]
    out_dim = packed["out_dim"]
    n_mid = packed["n_mid"]
    n_mid_alloc = max(n_mid, 1)

    # Batch tiling: one grid step for small batches (latency path, weights DMA
    # once); for large batches use <=512-row tiles and an even step count so
    # v7x's two TensorCores both get work on the "parallel" axis.
    batch8 = _round_up(batch, _SUBLANE)
    if batch8 <= _MAX_BATCH_TILE:
        n_steps = 1
        tm = batch8
    else:
        n_steps = -(-batch8 // _MAX_BATCH_TILE)
        if n_steps % 2:
            n_steps += 1
        tm = _round_up(-(-batch8 // n_steps), _SUBLANE)
    batch_pad = tm * n_steps

    # bf16 input (halves the dominant per-step HBM->VMEM DMA); pad only the
    # handful of trailing rows needed to fill the last tile (no feature pad).
    x_in = x.astype(jnp.bfloat16) if x.dtype != jnp.bfloat16 else x
    if batch_pad != batch:
        x_in = jnp.pad(x_in, ((0, batch_pad - batch), (0, 0)))

    kernel = _mlp_kernel_factory(n_mid)

    out = pl.pallas_call(
        kernel,
        out_shape=jax.ShapeDtypeStruct((batch_pad, out_dim), jnp.float32),
        grid=(n_steps,),
        in_specs=[
            pl.BlockSpec((tm, in_dim), lambda i: (i, 0)),            # x tile
            pl.BlockSpec((in_dim, w_pad), lambda i: (0, 0)),         # w0
            pl.BlockSpec((1, w_pad), lambda i: (0, 0)),              # b0
            pl.BlockSpec((n_mid_alloc, w_pad, w_pad),
                         lambda i: (0, 0, 0)),                        # mid W
            pl.BlockSpec((n_mid_alloc, 1, w_pad),
                         lambda i: (0, 0, 0)),                        # mid b
            pl.BlockSpec((w_pad, out_dim), lambda i: (0, 0)),        # w_last
            pl.BlockSpec((1, out_dim), lambda i: (0, 0)),            # b_last
        ],
        out_specs=pl.BlockSpec((tm, out_dim), lambda i: (i, 0)),
        compiler_params=pltpu.CompilerParams(
            dimension_semantics=("parallel",)),
    )(x_in, w0, b0, packed["wmid"], packed["bmid"], packed["wlast"],
      packed["blast"])

    return out[:batch]


def init_params(key, input_size, width=256, nlayers=10, output_width=2):
    """Deterministic parameter init mirroring MLPRegressor.__init__ shapes."""
    # Width-reduction loop exactly as in the PyTorch module.
    while width >= input_size:
        width = int(width * 0.8)

    # Linear layer (fan_in, fan_out) pairs in sequence order.
    layer_dims = [(input_size, width)]
    layer_dims += [(width, width)] * (int(np.floor(nlayers / 2)) - 1)
    layer_dims += [(width, width)] * int(np.ceil(nlayers / 2))
    layer_dims += [(width, output_width)]

    keys = jax.random.split(key, 2 * len(layer_dims) + 2)
    weights, biases = [], []
    for i, (fan_in, fan_out) in enumerate(layer_dims):
        bound = 1.0 / math.sqrt(fan_in)  # PyTorch nn.Linear default init range
        w = jax.random.uniform(
            keys[2 * i], (fan_in, fan_out), jnp.float32, -bound, bound)
        b = jax.random.uniform(
            keys[2 * i + 1], (fan_out,), jnp.float32, -bound, bound)
        weights.append(w)
        biases.append(b)

    params = {
        "gamma": jnp.ones((input_size,), jnp.float32),
        "beta": jnp.zeros((input_size,), jnp.float32),
        "running_mean": 0.1
        * jax.random.normal(keys[-2], (input_size,), jnp.float32),
        "running_var": jax.random.uniform(
            keys[-1], (input_size,), jnp.float32, 0.5, 1.5),
        "weights": weights,
        "biases": biases,
    }
    return params, width


def _elu_ref(v):
    return jnp.where(v > 0, v, jnp.exp(jnp.minimum(v, 0.0)) - 1.0)


def mlp_reference(x, params):
    """Pure-JAX f32 reference of the same forward pass."""
    h = x
    if x.shape[0] != 1:
        h = (h - params["running_mean"]) * jax.lax.rsqrt(
            params["running_var"] + BN_EPS)
        h = h * params["gamma"] + params["beta"]
    n = len(params["weights"])
    for i, (w, b) in enumerate(zip(params["weights"], params["biases"])):
        h = h @ w + b
        if i < n - 1:
            h = _elu_ref(h)
    return h


if __name__ == "__main__":
    key = jax.random.PRNGKey(0)
    k_x, k_p = jax.random.split(key)

    input_size, batch = 64, 8
    params, hidden_width = init_params(
        k_p, input_size, width=256, nlayers=10, output_width=2)
    packed = prepare_params(params)
    x = jax.random.normal(k_x, (batch, input_size), jnp.float32)

    # batch > 1 path (BatchNorm applied, folded into the first linear).
    out = jax.block_until_ready(mlp_regressor_forward(x, packed))
    ref = mlp_reference(x, params)
    assert out.shape == (batch, 2)
    np.testing.assert_allclose(
        np.asarray(out), np.asarray(ref), rtol=5e-2, atol=5e-2)

    # batch == 1 path (BatchNorm skipped, as in seqmodel[1:]).
    x1 = x[:1]
    out1 = jax.block_until_ready(mlp_regressor_forward(x1, packed))
    ref1 = mlp_reference(x1, params)
    assert out1.shape == (1, 2)
    np.testing.assert_allclose(
        np.asarray(out1), np.asarray(ref1), rtol=5e-2, atol=5e-2)

    print("KERNEL_OK")
</pallas_src>

<mosaic_0001>
module attributes {stable_mosaic.version = 11 : i64} {
  func.func @kernel(%arg0: i32, %arg1: memref<8x64xbf16, #tpu.memory_space<vmem>>, %arg2: memref<64x128xbf16, #tpu.memory_space<vmem>>, %arg3: memref<1x128xf32, #tpu.memory_space<vmem>>, %arg4: memref<9x128x128xbf16, #tpu.memory_space<vmem>>, %arg5: memref<9x1x128xf32, #tpu.memory_space<vmem>>, %arg6: memref<128x2xbf16, #tpu.memory_space<vmem>>, %arg7: memref<1x2xf32, #tpu.memory_space<vmem>>, %arg8: memref<8x2xf32, #tpu.memory_space<vmem>>) attributes {dimension_semantics = [#tpu.dimension_semantics<parallel>], iteration_bounds = array<i64: 1>, scalar_prefetch = 0 : i64, scratch_operands = 0 : i64, tpu.core_type = #tpu.core_type<tc>, window_params = [{transform_indices = @transform_0, window_bounds = array<i64: 8, 64>}, {pipeline_mode = #tpu.pipeline_mode<synchronous>, transform_indices = @transform_1, window_bounds = array<i64: 64, 128>}, {pipeline_mode = #tpu.pipeline_mode<synchronous>, transform_indices = @transform_2, window_bounds = array<i64: 1, 128>}, {pipeline_mode = #tpu.pipeline_mode<synchronous>, transform_indices = @transform_3, window_bounds = array<i64: 9, 128, 128>}, {pipeline_mode = #tpu.pipeline_mode<synchronous>, transform_indices = @transform_4, window_bounds = array<i64: 9, 1, 128>}, {pipeline_mode = #tpu.pipeline_mode<synchronous>, transform_indices = @transform_5, window_bounds = array<i64: 128, 2>}, {pipeline_mode = #tpu.pipeline_mode<synchronous>, transform_indices = @transform_6, window_bounds = array<i64: 1, 2>}, {transform_indices = @transform_7, window_bounds = array<i64: 8, 2>}]} {
    %c0 = arith.constant 0 : index
    %c0_0 = arith.constant 0 : index
    %0 = vector.load %arg1[%c0, %c0_0] : memref<8x64xbf16, #tpu.memory_space<vmem>>, vector<8x64xbf16>
    %c0_1 = arith.constant 0 : index
    %c0_2 = arith.constant 0 : index
    %1 = vector.load %arg2[%c0_1, %c0_2] : memref<64x128xbf16, #tpu.memory_space<vmem>>, vector<64x128xbf16>
    %cst = arith.constant dense<0.000000e+00> : vector<8x128xf32>
    %2 = tpu.matmul %0, %1, %cst {dimension_numbers = #tpu.dot_dimension_numbers<[1], [0], [0], [1], [0, 0, 1, 1], [], []>} : vector<8x64xbf16>, vector<64x128xbf16>, vector<8x128xf32> -> vector<8x128xf32>
    %c0_3 = arith.constant 0 : index
    %c0_4 = arith.constant 0 : index
    %3 = vector.load %arg3[%c0_3, %c0_4] : memref<1x128xf32, #tpu.memory_space<vmem>>, vector<1x128xf32>
    %4 = vector.broadcast %3 : vector<1x128xf32> to vector<8x128xf32>
    %5 = arith.addf %2, %4 : vector<8x128xf32>
    %cst_5 = arith.constant 0.000000e+00 : f32
    %6 = vector.broadcast %cst_5 : f32 to vector<8x128xf32>
    %7 = arith.cmpf ogt, %5, %6 : vector<8x128xf32>
    %8 = math.exp %5 : vector<8x128xf32>
    %cst_6 = arith.constant 1.000000e+00 : f32
    %9 = vector.broadcast %cst_6 : f32 to vector<8x128xf32>
    %10 = arith.subf %8, %9 : vector<8x128xf32>
    %11 = arith.select %7, %5, %10 : vector<8x128xi1>, vector<8x128xf32>
    %12 = arith.truncf %11 : vector<8x128xf32> to vector<8x128xbf16>
    %c0_i32 = arith.constant 0 : i32
    %13 = arith.index_cast %c0_i32 : i32 to index
    %c0_7 = arith.constant 0 : index
    %c0_8 = arith.constant 0 : index
    %14 = vector.load %arg4[%13, %c0_7, %c0_8] : memref<9x128x128xbf16, #tpu.memory_space<vmem>>, vector<1x128x128xbf16>
    %15 = vector.shape_cast %14 : vector<1x128x128xbf16> to vector<128x128xbf16>
    %cst_9 = arith.constant dense<0.000000e+00> : vector<8x128xf32>
    %16 = tpu.matmul %12, %15, %cst_9 {dimension_numbers = #tpu.dot_dimension_numbers<[1], [0], [0], [1], [0, 0, 1, 1], [], []>} : vector<8x128xbf16>, vector<128x128xbf16>, vector<8x128xf32> -> vector<8x128xf32>
    %17 = arith.index_cast %c0_i32 : i32 to index
    %c0_10 = arith.constant 0 : index
    %c0_11 = arith.constant 0 : index
    %18 = vector.load %arg5[%17, %c0_10, %c0_11] : memref<9x1x128xf32, #tpu.memory_space<vmem>>, vector<1x1x128xf32>
    %19 = vector.shape_cast %18 : vector<1x1x128xf32> to vector<1x128xf32>
    %20 = vector.broadcast %19 : vector<1x128xf32> to vector<8x128xf32>
    %21 = arith.addf %16, %20 : vector<8x128xf32>
    %cst_12 = arith.constant 0.000000e+00 : f32
    %22 = vector.broadcast %cst_12 : f32 to vector<8x128xf32>
    %23 = arith.cmpf ogt, %21, %22 : vector<8x128xf32>
    %24 = math.exp %21 : vector<8x128xf32>
    %cst_13 = arith.constant 1.000000e+00 : f32
    %25 = vector.broadcast %cst_13 : f32 to vector<8x128xf32>
    %26 = arith.subf %24, %25 : vector<8x128xf32>
    %27 = arith.select %23, %21, %26 : vector<8x128xi1>, vector<8x128xf32>
    %28 = arith.truncf %27 : vector<8x128xf32> to vector<8x128xbf16>
    %c1_i32 = arith.constant 1 : i32
    %29 = arith.index_cast %c1_i32 : i32 to index
    %c0_14 = arith.constant 0 : index
    %c0_15 = arith.constant 0 : index
    %30 = vector.load %arg4[%29, %c0_14, %c0_15] : memref<9x128x128xbf16, #tpu.memory_space<vmem>>, vector<1x128x128xbf16>
    %31 = vector.shape_cast %30 : vector<1x128x128xbf16> to vector<128x128xbf16>
    %cst_16 = arith.constant dense<0.000000e+00> : vector<8x128xf32>
    %32 = tpu.matmul %28, %31, %cst_16 {dimension_numbers = #tpu.dot_dimension_numbers<[1], [0], [0], [1], [0, 0, 1, 1], [], []>} : vector<8x128xbf16>, vector<128x128xbf16>, vector<8x128xf32> -> vector<8x128xf32>
    %33 = arith.index_cast %c1_i32 : i32 to index
    %c0_17 = arith.constant 0 : index
    %c0_18 = arith.constant 0 : index
    %34 = vector.load %arg5[%33, %c0_17, %c0_18] : memref<9x1x128xf32, #tpu.memory_space<vmem>>, vector<1x1x128xf32>
    %35 = vector.shape_cast %34 : vector<1x1x128xf32> to vector<1x128xf32>
    %36 = vector.broadcast %35 : vector<1x128xf32> to vector<8x128xf32>
    %37 = arith.addf %32, %36 : vector<8x128xf32>
    %cst_19 = arith.constant 0.000000e+00 : f32
    %38 = vector.broadcast %cst_19 : f32 to vector<8x128xf32>
    %39 = arith.cmpf ogt, %37, %38 : vector<8x128xf32>
    %40 = math.exp %37 : vector<8x128xf32>
    %cst_20 = arith.constant 1.000000e+00 : f32
    %41 = vector.broadcast %cst_20 : f32 to vector<8x128xf32>
    %42 = arith.subf %40, %41 : vector<8x128xf32>
    %43 = arith.select %39, %37, %42 : vector<8x128xi1>, vector<8x128xf32>
    %44 = arith.truncf %43 : vector<8x128xf32> to vector<8x128xbf16>
    %c2_i32 = arith.constant 2 : i32
    %45 = arith.index_cast %c2_i32 : i32 to index
    %c0_21 = arith.constant 0 : index
    %c0_22 = arith.constant 0 : index
    %46 = vector.load %arg4[%45, %c0_21, %c0_22] : memref<9x128x128xbf16, #tpu.memory_space<vmem>>, vector<1x128x128xbf16>
    %47 = vector.shape_cast %46 : vector<1x128x128xbf16> to vector<128x128xbf16>
    %cst_23 = arith.constant dense<0.000000e+00> : vector<8x128xf32>
    %48 = tpu.matmul %44, %47, %cst_23 {dimension_numbers = #tpu.dot_dimension_numbers<[1], [0], [0], [1], [0, 0, 1, 1], [], []>} : vector<8x128xbf16>, vector<128x128xbf16>, vector<8x128xf32> -> vector<8x128xf32>
    %49 = arith.index_cast %c2_i32 : i32 to index
    %c0_24 = arith.constant 0 : index
    %c0_25 = arith.constant 0 : index
    %50 = vector.load %arg5[%49, %c0_24, %c0_25] : memref<9x1x128xf32, #tpu.memory_space<vmem>>, vector<1x1x128xf32>
    %51 = vector.shape_cast %50 : vector<1x1x128xf32> to vector<1x128xf32>
    %52 = vector.broadcast %51 : vector<1x128xf32> to vector<8x128xf32>
    %53 = arith.addf %48, %52 : vector<8x128xf32>
    %cst_26 = arith.constant 0.000000e+00 : f32
    %54 = vector.broadcast %cst_26 : f32 to vector<8x128xf32>
    %55 = arith.cmpf ogt, %53, %54 : vector<8x128xf32>
    %56 = math.exp %53 : vector<8x128xf32>
    %cst_27 = arith.constant 1.000000e+00 : f32
    %57 = vector.broadcast %cst_27 : f32 to vector<8x128xf32>
    %58 = arith.subf %56, %57 : vector<8x128xf32>
    %59 = arith.select %55, %53, %58 : vector<8x128xi1>, vector<8x128xf32>
    %60 = arith.truncf %59 : vector<8x128xf32> to vector<8x128xbf16>
    %c3_i32 = arith.constant 3 : i32
    %61 = arith.index_cast %c3_i32 : i32 to index
    %c0_28 = arith.constant 0 : index
    %c0_29 = arith.constant 0 : index
    %62 = vector.load %arg4[%61, %c0_28, %c0_29] : memref<9x128x128xbf16, #tpu.memory_space<vmem>>, vector<1x128x128xbf16>
    %63 = vector.shape_cast %62 : vector<1x128x128xbf16> to vector<128x128xbf16>
    %cst_30 = arith.constant dense<0.000000e+00> : vector<8x128xf32>
    %64 = tpu.matmul %60, %63, %cst_30 {dimension_numbers = #tpu.dot_dimension_numbers<[1], [0], [0], [1], [0, 0, 1, 1], [], []>} : vector<8x128xbf16>, vector<128x128xbf16>, vector<8x128xf32> -> vector<8x128xf32>
    %65 = arith.index_cast %c3_i32 : i32 to index
    %c0_31 = arith.constant 0 : index
    %c0_32 = arith.constant 0 : index
    %66 = vector.load %arg5[%65, %c0_31, %c0_32] : memref<9x1x128xf32, #tpu.memory_space<vmem>>, vector<1x1x128xf32>
    %67 = vector.shape_cast %66 : vector<1x1x128xf32> to vector<1x128xf32>
    %68 = vector.broadcast %67 : vector<1x128xf32> to vector<8x128xf32>
    %69 = arith.addf %64, %68 : vector<8x128xf32>
    %cst_33 = arith.constant 0.000000e+00 : f32
    %70 = vector.broadcast %cst_33 : f32 to vector<8x128xf32>
    %71 = arith.cmpf ogt, %69, %70 : vector<8x128xf32>
    %72 = math.exp %69 : vector<8x128xf32>
    %cst_34 = arith.constant 1.000000e+00 : f32
    %73 = vector.broadcast %cst_34 : f32 to vector<8x128xf32>
    %74 = arith.subf %72, %73 : vector<8x128xf32>
    %75 = arith.select %71, %69, %74 : vector<8x128xi1>, vector<8x128xf32>
    %76 = arith.truncf %75 : vector<8x128xf32> to vector<8x128xbf16>
    %c4_i32 = arith.constant 4 : i32
    %77 = arith.index_cast %c4_i32 : i32 to index
    %c0_35 = arith.constant 0 : index
    %c0_36 = arith.constant 0 : index
    %78 = vector.load %arg4[%77, %c0_35, %c0_36] : memref<9x128x128xbf16, #tpu.memory_space<vmem>>, vector<1x128x128xbf16>
    %79 = vector.shape_cast %78 : vector<1x128x128xbf16> to vector<128x128xbf16>
    %cst_37 = arith.constant dense<0.000000e+00> : vector<8x128xf32>
    %80 = tpu.matmul %76, %79, %cst_37 {dimension_numbers = #tpu.dot_dimension_numbers<[1], [0], [0], [1], [0, 0, 1, 1], [], []>} : vector<8x128xbf16>, vector<128x128xbf16>, vector<8x128xf32> -> vector<8x128xf32>
    %81 = arith.index_cast %c4_i32 : i32 to index
    %c0_38 = arith.constant 0 : index
    %c0_39 = arith.constant 0 : index
    %82 = vector.load %arg5[%81, %c0_38, %c0_39] : memref<9x1x128xf32, #tpu.memory_space<vmem>>, vector<1x1x128xf32>
    %83 = vector.shape_cast %82 : vector<1x1x128xf32> to vector<1x128xf32>
    %84 = vector.broadcast %83 : vector<1x128xf32> to vector<8x128xf32>
    %85 = arith.addf %80, %84 : vector<8x128xf32>
    %cst_40 = arith.constant 0.000000e+00 : f32
    %86 = vector.broadcast %cst_40 : f32 to vector<8x128xf32>
    %87 = arith.cmpf ogt, %85, %86 : vector<8x128xf32>
    %88 = math.exp %85 : vector<8x128xf32>
    %cst_41 = arith.constant 1.000000e+00 : f32
    %89 = vector.broadcast %cst_41 : f32 to vector<8x128xf32>
    %90 = arith.subf %88, %89 : vector<8x128xf32>
    %91 = arith.select %87, %85, %90 : vector<8x128xi1>, vector<8x128xf32>
    %92 = arith.truncf %91 : vector<8x128xf32> to vector<8x128xbf16>
    %c5_i32 = arith.constant 5 : i32
    %93 = arith.index_cast %c5_i32 : i32 to index
    %c0_42 = arith.constant 0 : index
    %c0_43 = arith.constant 0 : index
    %94 = vector.load %arg4[%93, %c0_42, %c0_43] : memref<9x128x128xbf16, #tpu.memory_space<vmem>>, vector<1x128x128xbf16>
    %95 = vector.shape_cast %94 : vector<1x128x128xbf16> to vector<128x128xbf16>
    %cst_44 = arith.constant dense<0.000000e+00> : vector<8x128xf32>
    %96 = tpu.matmul %92, %95, %cst_44 {dimension_numbers = #tpu.dot_dimension_numbers<[1], [0], [0], [1], [0, 0, 1, 1], [], []>} : vector<8x128xbf16>, vector<128x128xbf16>, vector<8x128xf32> -> vector<8x128xf32>
    %97 = arith.index_cast %c5_i32 : i32 to index
    %c0_45 = arith.constant 0 : index
    %c0_46 = arith.constant 0 : index
    %98 = vector.load %arg5[%97, %c0_45, %c0_46] : memref<9x1x128xf32, #tpu.memory_space<vmem>>, vector<1x1x128xf32>
    %99 = vector.shape_cast %98 : vector<1x1x128xf32> to vector<1x128xf32>
    %100 = vector.broadcast %99 : vector<1x128xf32> to vector<8x128xf32>
    %101 = arith.addf %96, %100 : vector<8x128xf32>
    %cst_47 = arith.constant 0.000000e+00 : f32
    %102 = vector.broadcast %cst_47 : f32 to vector<8x128xf32>
    %103 = arith.cmpf ogt, %101, %102 : vector<8x128xf32>
    %104 = math.exp %101 : vector<8x128xf32>
    %cst_48 = arith.constant 1.000000e+00 : f32
    %105 = vector.broadcast %cst_48 : f32 to vector<8x128xf32>
    %106 = arith.subf %104, %105 : vector<8x128xf32>
    %107 = arith.select %103, %101, %106 : vector<8x128xi1>, vector<8x128xf32>
    %108 = arith.truncf %107 : vector<8x128xf32> to vector<8x128xbf16>
    %c6_i32 = arith.constant 6 : i32
    %109 = arith.index_cast %c6_i32 : i32 to index
    %c0_49 = arith.constant 0 : index
    %c0_50 = arith.constant 0 : index
    %110 = vector.load %arg4[%109, %c0_49, %c0_50] : memref<9x128x128xbf16, #tpu.memory_space<vmem>>, vector<1x128x128xbf16>
    %111 = vector.shape_cast %110 : vector<1x128x128xbf16> to vector<128x128xbf16>
    %cst_51 = arith.constant dense<0.000000e+00> : vector<8x128xf32>
    %112 = tpu.matmul %108, %111, %cst_51 {dimension_numbers = #tpu.dot_dimension_numbers<[1], [0], [0], [1], [0, 0, 1, 1], [], []>} : vector<8x128xbf16>, vector<128x128xbf16>, vector<8x128xf32> -> vector<8x128xf32>
    %113 = arith.index_cast %c6_i32 : i32 to index
    %c0_52 = arith.constant 0 : index
    %c0_53 = arith.constant 0 : index
    %114 = vector.load %arg5[%113, %c0_52, %c0_53] : memref<9x1x128xf32, #tpu.memory_space<vmem>>, vector<1x1x128xf32>
    %115 = vector.shape_cast %114 : vector<1x1x128xf32> to vector<1x128xf32>
    %116 = vector.broadcast %115 : vector<1x128xf32> to vector<8x128xf32>
    %117 = arith.addf %112, %116 : vector<8x128xf32>
    %cst_54 = arith.constant 0.000000e+00 : f32
    %118 = vector.broadcast %cst_54 : f32 to vector<8x128xf32>
    %119 = arith.cmpf ogt, %117, %118 : vector<8x128xf32>
    %120 = math.exp %117 : vector<8x128xf32>
    %cst_55 = arith.constant 1.000000e+00 : f32
    %121 = vector.broadcast %cst_55 : f32 to vector<8x128xf32>
    %122 = arith.subf %120, %121 : vector<8x128xf32>
    %123 = arith.select %119, %117, %122 : vector<8x128xi1>, vector<8x128xf32>
    %124 = arith.truncf %123 : vector<8x128xf32> to vector<8x128xbf16>
    %c7_i32 = arith.constant 7 : i32
    %125 = arith.index_cast %c7_i32 : i32 to index
    %c0_56 = arith.constant 0 : index
    %c0_57 = arith.constant 0 : index
    %126 = vector.load %arg4[%125, %c0_56, %c0_57] : memref<9x128x128xbf16, #tpu.memory_space<vmem>>, vector<1x128x128xbf16>
    %127 = vector.shape_cast %126 : vector<1x128x128xbf16> to vector<128x128xbf16>
    %cst_58 = arith.constant dense<0.000000e+00> : vector<8x128xf32>
    %128 = tpu.matmul %124, %127, %cst_58 {dimension_numbers = #tpu.dot_dimension_numbers<[1], [0], [0], [1], [0, 0, 1, 1], [], []>} : vector<8x128xbf16>, vector<128x128xbf16>, vector<8x128xf32> -> vector<8x128xf32>
    %129 = arith.index_cast %c7_i32 : i32 to index
    %c0_59 = arith.constant 0 : index
    %c0_60 = arith.constant 0 : index
    %130 = vector.load %arg5[%129, %c0_59, %c0_60] : memref<9x1x128xf32, #tpu.memory_space<vmem>>, vector<1x1x128xf32>
    %131 = vector.shape_cast %130 : vector<1x1x128xf32> to vector<1x128xf32>
    %132 = vector.broadcast %131 : vector<1x128xf32> to vector<8x128xf32>
    %133 = arith.addf %128, %132 : vector<8x128xf32>
    %cst_61 = arith.constant 0.000000e+00 : f32
    %134 = vector.broadcast %cst_61 : f32 to vector<8x128xf32>
    %135 = arith.cmpf ogt, %133, %134 : vector<8x128xf32>
    %136 = math.exp %133 : vector<8x128xf32>
    %cst_62 = arith.constant 1.000000e+00 : f32
    %137 = vector.broadcast %cst_62 : f32 to vector<8x128xf32>
    %138 = arith.subf %136, %137 : vector<8x128xf32>
    %139 = arith.select %135, %133, %138 : vector<8x128xi1>, vector<8x128xf32>
    %140 = arith.truncf %139 : vector<8x128xf32> to vector<8x128xbf16>
    %c8_i32 = arith.constant 8 : i32
    %141 = arith.index_cast %c8_i32 : i32 to index
    %c0_63 = arith.constant 0 : index
    %c0_64 = arith.constant 0 : index
    %142 = vector.load %arg4[%141, %c0_63, %c0_64] : memref<9x128x128xbf16, #tpu.memory_space<vmem>>, vector<1x128x128xbf16>
    %143 = vector.shape_cast %142 : vector<1x128x128xbf16> to vector<128x128xbf16>
    %cst_65 = arith.constant dense<0.000000e+00> : vector<8x128xf32>
    %144 = tpu.matmul %140, %143, %cst_65 {dimension_numbers = #tpu.dot_dimension_numbers<[1], [0], [0], [1], [0, 0, 1, 1], [], []>} : vector<8x128xbf16>, vector<128x128xbf16>, vector<8x128xf32> -> vector<8x128xf32>
    %145 = arith.index_cast %c8_i32 : i32 to index
    %c0_66 = arith.constant 0 : index
    %c0_67 = arith.constant 0 : index
    %146 = vector.load %arg5[%145, %c0_66, %c0_67] : memref<9x1x128xf32, #tpu.memory_space<vmem>>, vector<1x1x128xf32>
    %147 = vector.shape_cast %146 : vector<1x1x128xf32> to vector<1x128xf32>
    %148 = vector.broadcast %147 : vector<1x128xf32> to vector<8x128xf32>
    %149 = arith.addf %144, %148 : vector<8x128xf32>
    %cst_68 = arith.constant 0.000000e+00 : f32
    %150 = vector.broadcast %cst_68 : f32 to vector<8x128xf32>
    %151 = arith.cmpf ogt, %149, %150 : vector<8x128xf32>
    %152 = math.exp %149 : vector<8x128xf32>
    %cst_69 = arith.constant 1.000000e+00 : f32
    %153 = vector.broadcast %cst_69 : f32 to vector<8x128xf32>
    %154 = arith.subf %152, %153 : vector<8x128xf32>
    %155 = arith.select %151, %149, %154 : vector<8x128xi1>, vector<8x128xf32>
    %156 = arith.truncf %155 : vector<8x128xf32> to vector<8x128xbf16>
    %c9_i32 = arith.constant 9 : i32
    %c0_70 = arith.constant 0 : index
    %c0_71 = arith.constant 0 : index
    %157 = vector.load %arg6[%c0_70, %c0_71] : memref<128x2xbf16, #tpu.memory_space<vmem>>, vector<128x2xbf16>
    %cst_72 = arith.constant dense<0.000000e+00> : vector<8x2xf32>
    %158 = tpu.matmul %156, %157, %cst_72 {dimension_numbers = #tpu.dot_dimension_numbers<[1], [0], [0], [1], [0, 0, 1, 1], [], []>} : vector<8x128xbf16>, vector<128x2xbf16>, vector<8x2xf32> -> vector<8x2xf32>
    %c0_73 = arith.constant 0 : index
    %c0_74 = arith.constant 0 : index
    %159 = vector.load %arg7[%c0_73, %c0_74] : memref<1x2xf32, #tpu.memory_space<vmem>>, vector<1x2xf32>
    %160 = vector.broadcast %159 : vector<1x2xf32> to vector<8x2xf32>
    %161 = arith.addf %158, %160 : vector<8x2xf32>
    %c0_75 = arith.constant 0 : index
    %c0_76 = arith.constant 0 : index
    %162 = vector.load %arg8[%c0_75, %c0_76] : memref<8x2xf32, #tpu.memory_space<vmem>>, vector<8x2xf32>
    tpu.vector_store %arg8[%c0_75, %c0_76], %161 {strides = array<i32>} : memref<8x2xf32, #tpu.memory_space<vmem>>, vector<8x2xf32>,
    return
  }
  func.func @transform_0(%arg0: i32) -> (i32, i32) {
    %c0_i32 = arith.constant 0 : i32
    %c0_i32_0 = arith.constant 0 : i32
    return %arg0, %c0_i32 : i32, i32
  }
  func.func @transform_1(%arg0: i32) -> (i32, i32) {
    %c0_i32 = arith.constant 0 : i32
    %c0_i32_0 = arith.constant 0 : i32
    %c0_i32_1 = arith.constant 0 : i32
    return %c0_i32, %c0_i32_0 : i32, i32
  }
  func.func @transform_2(%arg0: i32) -> (i32, i32) {
    %c0_i32 = arith.constant 0 : i32
    %c0_i32_0 = arith.constant 0 : i32
    %c0_i32_1 = arith.constant 0 : i32
    return %c0_i32, %c0_i32_0 : i32, i32
  }
  func.func @transform_3(%arg0: i32) -> (i32, i32, i32) {
    %c0_i32 = arith.constant 0 : i32
    %c0_i32_0 = arith.constant 0 : i32
    %c0_i32_1 = arith.constant 0 : i32
    %c0_i32_2 = arith.constant 0 : i32
    return %c0_i32, %c0_i32_0, %c0_i32_1 : i32, i32, i32
  }
  func.func @transform_4(%arg0: i32) -> (i32, i32, i32) {
    %c0_i32 = arith.constant 0 : i32
    %c0_i32_0 = arith.constant 0 : i32
    %c0_i32_1 = arith.constant 0 : i32
    %c0_i32_2 = arith.constant 0 : i32
    return %c0_i32, %c0_i32_0, %c0_i32_1 : i32, i32, i32
  }
  func.func @transform_5(%arg0: i32) -> (i32, i32) {
    %c0_i32 = arith.constant 0 : i32
    %c0_i32_0 = arith.constant 0 : i32
    %c0_i32_1 = arith.constant 0 : i32
    return %c0_i32, %c0_i32_0 : i32, i32
  }
  func.func @transform_6(%arg0: i32) -> (i32, i32) {
    %c0_i32 = arith.constant 0 : i32
    %c0_i32_0 = arith.constant 0 : i32
    %c0_i32_1 = arith.constant 0 : i32
    return %c0_i32, %c0_i32_0 : i32, i32
  }
  func.func @transform_7(%arg0: i32) -> (i32, i32) {
    %c0_i32 = arith.constant 0 : i32
    %c0_i32_0 = arith.constant 0 : i32
    return %arg0, %c0_i32 : i32, i32
  }
}

</mosaic_0001>

<llo_original>
// kernel: tpu_custom_call.1
$region0: #{tpu_custom_call.1}
  #allocation0 [shape = 'u32[]', space=smem, size = 0x4, offset = 0x4, fixed_abs, tag = 'smem constant byte address 0x4 - core index']
  #allocation1 [shape = 'u32[144,128]{1,0:T(1,128)}', space=vmem, size = 0x12000, scoped, tag = 'internal scratch']
  %s0 = inlined_call_operand.vmem [shape: bf16[8,64], index: 0, kind: input, shape index: {}]
  %s1 = inlined_call_operand.vmem [shape: bf16[64,128], index: 1, kind: input, shape index: {}]
  %s2 = inlined_call_operand.vmem [shape: f32[1,128], index: 2, kind: input, shape index: {}]
  %s3 = inlined_call_operand.hbm [shape: bf16[9,128,128], index: 3, kind: input, shape index: {}]
  %s4 = inlined_call_operand.vmem [shape: f32[9,1,128], index: 4, kind: input, shape index: {}]
  %s5 = inlined_call_operand.vmem [shape: bf16[128,2], index: 5, kind: input, shape index: {}]
  %s6 = inlined_call_operand.vmem [shape: f32[1,2], index: 6, kind: input, shape index: {}]
  %s7 = inlined_call_operand.vmem [shape: f32[8,2], index: 7, kind: output, shape index: {}]
  %s8 = sld [smem:[#allocation0]]
  $region42: #{tpu_custom_call.1} parent=0
    _
  %s10 = ssub.s32 1, %s8
  %s11 = scalar_select 0, %s10, %s8
  $region1: #{tpu_custom_call.1} parent=0
    #allocation2 [shape = 'u8[294912]{0}', space=vmem, size = 0x48000, scoped, tag = 'input window, operand 3, single buffered']
    #allocation3 [shape = 's32[1]{0}', space=sflag, size = 0x4, scoped, tag = 'scoped memory for tpu_custom_call.1']
    %12 = vsyncpa [#allocation3], 0
    // Predicated region
    $region2: #{tpu_custom_call.1} parent=1 // pred_check
      _
    $region3: #{tpu_custom_call.1} parent=1 // pred_check_branch
      %14 = sbr.rel (0) target = $region5
    $region4: #{tpu_custom_call.1} parent=1 // pred_region
      _
    $region5: #{tpu_custom_call.1} parent=1 // pred_fallthru
      _
    // Predicated region
    $region6: #{tpu_custom_call.1} parent=1 // pred_check
      _
    $region7: #{tpu_custom_call.1} parent=1 // pred_check_branch
      %16 = sbr.rel (0) target = $region9
    $region8: #{tpu_custom_call.1} parent=1 // pred_region
      _
    $region9: #{tpu_custom_call.1} parent=1 // pred_fallthru
      _
    // Predicated region
    $region10: #{tpu_custom_call.1} parent=1 // pred_check
      _
    $region11: #{tpu_custom_call.1} parent=1 // pred_check_branch
      %18 = sbr.rel (0) target = $region13
    $region12: #{tpu_custom_call.1} parent=1 // pred_region
      _
    $region13: #{tpu_custom_call.1} parent=1 // pred_fallthru
      _
    // Predicated region
    $region14: #{tpu_custom_call.1} parent=1 // pred_check
      _
    $region15: #{tpu_custom_call.1} parent=1 // pred_check_branch
      %20 = sbr.rel (0) target = $region17
    $region16: #{tpu_custom_call.1} parent=1 // pred_region
      %s22 = ssub.s32 9216, 9216
      %23 = vsyncadd [#allocation3], %s22
      %s24 = sshll.u32 [#allocation2], 4
      %s25 = int_to_ptr.vmem [resolvable:$true] %s24
      %30 = dma.hbm_to_vmem [thread:$0]  %s3, 9216, %s25, [#allocation3], 64, 64, 4
    $region17: #{tpu_custom_call.1} parent=1 // pred_fallthru
      _
    // Predicated region
    $region18: #{tpu_custom_call.1} parent=1 // pred_check
      _
    $region19: #{tpu_custom_call.1} parent=1 // pred_check_branch
      %32 = sbr.rel (0) target = $region21
    $region20: #{tpu_custom_call.1} parent=1 // pred_region
      _
    $region21: #{tpu_custom_call.1} parent=1 // pred_fallthru
      _
    // Predicated region
    $region22: #{tpu_custom_call.1} parent=1 // pred_check
      _
    $region23: #{tpu_custom_call.1} parent=1 // pred_check_branch
      %34 = sbr.rel (0) target = $region25
    $region24: #{tpu_custom_call.1} parent=1 // pred_region
      _
    $region25: #{tpu_custom_call.1} parent=1 // pred_fallthru
      _
    // Predicated region
    $region26: #{tpu_custom_call.1} parent=1 // pred_check
      _
    $region27: #{tpu_custom_call.1} parent=1 // pred_check_branch
      %36 = sbr.rel (0) target = $region29
    $region28: #{tpu_custom_call.1} parent=1 // pred_region
      _
    $region29: #{tpu_custom_call.1} parent=1 // pred_fallthru
      _
    // Predicated region
    $region30: #{tpu_custom_call.1} parent=1 // pred_check
      _
    $region31: #{tpu_custom_call.1} parent=1 // pred_check_branch
      %38 = sbr.rel (0) target = $region33
    $region32: #{tpu_custom_call.1} parent=1 // pred_region
      %39 = dma.done [#allocation3], 9216
    $region33: #{tpu_custom_call.1} parent=1 // pred_fallthru
      _
    %v41 = vld [vmem:[%s0] sm:$0xf]
    %v42 = vld [vmem:[%s1] sm:$0xf]
    %v43 = vld [vmem:[%s1 + $0x4] sm:$0xf]
    %v44 = vld [vmem:[%s1 + $0x8] sm:$0xf]
    %v45 = vld [vmem:[%s1 + $0xc] sm:$0xf]
    %v46 = vld [vmem:[%s1 + $0x10] sm:$0xf]
    %v47 = vld [vmem:[%s1 + $0x14] sm:$0xf]
    %v48 = vld [vmem:[%s1 + $0x18] sm:$0xf]
    %v49 = vld [vmem:[%s1 + $0x1c] sm:$0xf]
    %v50 = vld [vmem:[%s2] sm:$0x1]
    %v52 = vlaneseq
    %v53 = vshrl.u32 %v52, 7
    %v54 = vsub.s32 0, %v53
    %v55 = vrot.slane %v50, %v54
    %v65 = vunpack.c.l.b16 %v42
    %v66 = vunpack.c.l.b16 %v43
    %v67 = vunpack.c.l.b16 %v44
    %v68 = vunpack.c.l.b16 %v45
    %v69 = vunpack.c.l.b16 %v46
    %v70 = vunpack.c.l.b16 %v47
    %v71 = vunpack.c.l.b16 %v48
    %v72 = vunpack.c.l.b16 %v49
    %v73 = vpack.c.b16 %v66, %v65
    %v74 = vpack.c.b16 %v68, %v67
    %v75 = vpack.c.b16 %v70, %v69
    %v76 = vpack.c.b16 %v72, %v71
    %vm81 = vcmask 523264
    %v83 = vsel %vm81, %v41, 0
    %85 = vmatprep.subr.bf16.mxu0 0
    %86 = vmatpush1.bf16.msra.mxu0 %v73
    %87 = vmatprep.subr.bf16.mxu0 0
    %88 = vmatpush1.bf16.msra.mxu0 %v74
    %89 = vmatprep.subr.bf16.mxu0 0
    %90 = vmatpush1.bf16.msra.mxu0 %v75
    %91 = vmatprep.subr.bf16.mxu0 0
    %92 = vmatpush1.bf16.msra.mxu0 %v76
    %93 = vmatprep.subr.bf16.mxu0 0
    %94 = vmatpush1.bf16.msra.mxu0 0
    %95 = vmatprep.subr.bf16.mxu0 0
    %96 = vmatpush1.bf16.msra.mxu0 0
    %97 = vmatprep.subr.bf16.mxu0 0
    %98 = vmatpush1.bf16.msra.mxu0 0
    %99 = vmatprep.subr.bf16.mxu0 0
    %100 = vmatpush1.bf16.msra.mxu0 0
    %101 = vmatprep.subr.bf16.mxu0 0
    %102 = vmatpush1.bf16.msra.mxu0 0
    %103 = vmatprep.subr.bf16.mxu0 0
    %104 = vmatpush1.bf16.msra.mxu0 0
    %105 = vmatprep.subr.bf16.mxu0 0
    %106 = vmatpush1.bf16.msra.mxu0 0
    %107 = vmatprep.subr.bf16.mxu0 0
    %108 = vmatpush1.bf16.msra.mxu0 0
    %109 = vmatprep.subr.bf16.mxu0 0
    %110 = vmatpush1.bf16.msra.mxu0 0
    %111 = vmatprep.subr.bf16.mxu0 0
    %112 = vmatpush1.bf16.msra.mxu0 0
    %113 = vmatprep.subr.bf16.mxu0 0
    %114 = vmatpush1.bf16.msra.mxu0 0
    %115 = vmatprep.subr.bf16.mxu0 0
    %116 = vmatpush1.bf16.msra.mxu0 0
    %117 = vmatprep.mubr.bf16.mxu0 0
    %118 = vmatmul.mubr.bf16.gmra.mrb[0].mxu0 %v83
    %v119 = vpop.f32.mrb[0].mxu0
    %v120 = vadd.f32 %v55, %v119
    %v121 = vpop.f32.mrb[0].mxu0
    %v122 = vpop.f32.mrb[0].mxu0
    %v123 = vpop.f32.mrb[0].mxu0
    %124 = vdwg.mxu0
    %vm125 = vcmp.gt.f32.partialorder %v120, 0.0
    %v126 = vmul.f32 %v120, 1.442695
    %v127 = vpow.pop %v126
    %v128 = vsub.f32 %v127, 1.0
    %v129 = vsel %vm125, %v120, %v128
    %v130 = vpack.c.bf16 %v129, %v129
    %v131 = vld [vmem:[#allocation2] sm:$0xf]
    %v132 = vld [vmem:[#allocation2 + $0x4] sm:$0xf]
    %v133 = vld [vmem:[#allocation2 + $0x8] sm:$0xf]
    %v134 = vld [vmem:[#allocation2 + $0xc] sm:$0xf]
    %v135 = vld [vmem:[#allocation2 + $0x10] sm:$0xf]
    %v136 = vld [vmem:[#allocation2 + $0x14] sm:$0xf]
    %v137 = vld [vmem:[#allocation2 + $0x18] sm:$0xf]
    %v138 = vld [vmem:[#allocation2 + $0x1c] sm:$0xf]
    %v139 = vld [vmem:[#allocation2 + $0x20] sm:$0xf]
    %v140 = vld [vmem:[#allocation2 + $0x24] sm:$0xf]
    %v141 = vld [vmem:[#allocation2 + $0x28] sm:$0xf]
    %v142 = vld [vmem:[#allocation2 + $0x2c] sm:$0xf]
    %v143 = vld [vmem:[#allocation2 + $0x30] sm:$0xf]
    %v144 = vld [vmem:[#allocation2 + $0x34] sm:$0xf]
    %v145 = vld [vmem:[#allocation2 + $0x38] sm:$0xf]
    %v146 = vld [vmem:[#allocation2 + $0x3c] sm:$0xf]
    %v147 = vld [vmem:[%s4] sm:$0x1]
    %v149 = vlaneseq
    %v150 = vshrl.u32 %v149, 7
    %v151 = vsub.s32 0, %v150
    %v152 = vrot.slane %v147, %v151
    %v170 = vunpack.c.l.b16 %v131
    %v171 = vunpack.c.l.b16 %v132
    %v172 = vunpack.c.l.b16 %v133
    %v173 = vunpack.c.l.b16 %v134
    %v174 = vunpack.c.l.b16 %v135
    %v175 = vunpack.c.l.b16 %v136
    %v176 = vunpack.c.l.b16 %v137
    %v177 = vunpack.c.l.b16 %v138
    %v178 = vunpack.c.l.b16 %v139
    %v179 = vunpack.c.l.b16 %v140
    %v180 = vunpack.c.l.b16 %v141
    %v181 = vunpack.c.l.b16 %v142
    %v182 = vunpack.c.l.b16 %v143
    %v183 = vunpack.c.l.b16 %v144
    %v184 = vunpack.c.l.b16 %v145
    %v185 = vunpack.c.l.b16 %v146
    %v186 = vpack.c.b16 %v171, %v170
    %v187 = vpack.c.b16 %v173, %v172
    %v188 = vpack.c.b16 %v175, %v174
    %v189 = vpack.c.b16 %v177, %v176
    %v190 = vpack.c.b16 %v179, %v178
    %v191 = vpack.c.b16 %v181, %v180
    %v192 = vpack.c.b16 %v183, %v182
    %v193 = vpack.c.b16 %v185, %v184
    %202 = vmatprep.subr.bf16.mxu0 0
    %203 = vmatpush1.bf16.msra.mxu0 %v186
    %204 = vmatprep.subr.bf16.mxu0 0
    %205 = vmatpush1.bf16.msra.mxu0 %v187
    %206 = vmatprep.subr.bf16.mxu0 0
    %207 = vmatpush1.bf16.msra.mxu0 %v188
    %208 = vmatprep.subr.bf16.mxu0 0
    %209 = vmatpush1.bf16.msra.mxu0 %v189
    %210 = vmatprep.subr.bf16.mxu0 0
    %211 = vmatpush1.bf16.msra.mxu0 %v190
    %212 = vmatprep.subr.bf16.mxu0 0
    %213 = vmatpush1.bf16.msra.mxu0 %v191
    %214 = vmatprep.subr.bf16.mxu0 0
    %215 = vmatpush1.bf16.msra.mxu0 %v192
    %216 = vmatprep.subr.bf16.mxu0 0
    %217 = vmatpush1.bf16.msra.mxu0 %v193
    %218 = vmatprep.subr.bf16.mxu0 0
    %219 = vmatpush1.bf16.msra.mxu0 0
    %220 = vmatprep.subr.bf16.mxu0 0
    %221 = vmatpush1.bf16.msra.mxu0 0
    %222 = vmatprep.subr.bf16.mxu0 0
    %223 = vmatpush1.bf16.msra.mxu0 0
    %224 = vmatprep.subr.bf16.mxu0 0
    %225 = vmatpush1.bf16.msra.mxu0 0
    %226 = vmatprep.subr.bf16.mxu0 0
    %227 = vmatpush1.bf16.msra.mxu0 0
    %228 = vmatprep.subr.bf16.mxu0 0
    %229 = vmatpush1.bf16.msra.mxu0 0
    %230 = vmatprep.subr.bf16.mxu0 0
    %231 = vmatpush1.bf16.msra.mxu0 0
    %232 = vmatprep.subr.bf16.mxu0 0
    %233 = vmatpush1.bf16.msra.mxu0 0
    %234 = vmatprep.mubr.bf16.mxu0 0
    %235 = vmatmul.mubr.bf16.gmra.mrb[0].mxu0 %v130
    %v236 = vpop.f32.mrb[0].mxu0
    %v237 = vadd.f32 %v152, %v236
    %v238 = vpop.f32.mrb[0].mxu0
    %v239 = vpop.f32.mrb[0].mxu0
    %v240 = vpop.f32.mrb[0].mxu0
    %241 = vdwg.mxu0
    %vm242 = vcmp.gt.f32.partialorder %v237, 0.0
    %v243 = vmul.f32 %v237, 1.442695
    %v244 = vpow.pop %v243
    %v245 = vsub.f32 %v244, 1.0
    %v246 = vsel %vm242, %v237, %v245
    %v247 = vpack.c.bf16 %v246, %v246
    %s248 = scalar_lea.vmem [#allocation2], 64
    %v249 = vld [vmem:[%s248] sm:$0xf]
    %v250 = vld [vmem:[%s248 + $0x4] sm:$0xf]
    %v251 = vld [vmem:[%s248 + $0x8] sm:$0xf]
    %v252 = vld [vmem:[%s248 + $0xc] sm:$0xf]
    %v253 = vld [vmem:[%s248 + $0x10] sm:$0xf]
    %v254 = vld [vmem:[%s248 + $0x14] sm:$0xf]
    %v255 = vld [vmem:[%s248 + $0x18] sm:$0xf]
    %v256 = vld [vmem:[%s248 + $0x1c] sm:$0xf]
    %v257 = vld [vmem:[%s248 + $0x20] sm:$0xf]
    %v258 = vld [vmem:[%s248 + $0x24] sm:$0xf]
    %v259 = vld [vmem:[%s248 + $0x28] sm:$0xf]
    %v260 = vld [vmem:[%s248 + $0x2c] sm:$0xf]
    %v261 = vld [vmem:[%s248 + $0x30] sm:$0xf]
    %v262 = vld [vmem:[%s248 + $0x34] sm:$0xf]
    %v263 = vld [vmem:[%s248 + $0x38] sm:$0xf]
    %v264 = vld [vmem:[%s248 + $0x3c] sm:$0xf]
    %s265 = scalar_lea.vmem %s4, 1
    %v266 = vld [vmem:[%s265] sm:$0x1]
    %v268 = vlaneseq
    %v269 = vshrl.u32 %v268, 7
    %v270 = vsub.s32 0, %v269
    %v271 = vrot.slane %v266, %v270
    %v289 = vunpack.c.l.b16 %v249
    %v290 = vunpack.c.l.b16 %v250
    %v291 = vunpack.c.l.b16 %v251
    %v292 = vunpack.c.l.b16 %v252
    %v293 = vunpack.c.l.b16 %v253
    %v294 = vunpack.c.l.b16 %v254
    %v295 = vunpack.c.l.b16 %v255
    %v296 = vunpack.c.l.b16 %v256
    %v297 = vunpack.c.l.b16 %v257
    %v298 = vunpack.c.l.b16 %v258
    %v299 = vunpack.c.l.b16 %v259
    %v300 = vunpack.c.l.b16 %v260
    %v301 = vunpack.c.l.b16 %v261
    %v302 = vunpack.c.l.b16 %v262
    %v303 = vunpack.c.l.b16 %v263
    %v304 = vunpack.c.l.b16 %v264
    %v305 = vpack.c.b16 %v290, %v289
    %v306 = vpack.c.b16 %v292, %v291
    %v307 = vpack.c.b16 %v294, %v293
    %v308 = vpack.c.b16 %v296, %v295
    %v309 = vpack.c.b16 %v298, %v297
    %v310 = vpack.c.b16 %v300, %v299
    %v311 = vpack.c.b16 %v302, %v301
    %v312 = vpack.c.b16 %v304, %v303
    %321 = vmatprep.subr.bf16.mxu0 0
    %322 = vmatpush1.bf16.msra.mxu0 %v305
    %323 = vmatprep.subr.bf16.mxu0 0
    %324 = vmatpush1.bf16.msra.mxu0 %v306
    %325 = vmatprep.subr.bf16.mxu0 0
    %326 = vmatpush1.bf16.msra.mxu0 %v307
    %327 = vmatprep.subr.bf16.mxu0 0
    %328 = vmatpush1.bf16.msra.mxu0 %v308
    %329 = vmatprep.subr.bf16.mxu0 0
    %330 = vmatpush1.bf16.msra.mxu0 %v309
    %331 = vmatprep.subr.bf16.mxu0 0
    %332 = vmatpush1.bf16.msra.mxu0 %v310
    %333 = vmatprep.subr.bf16.mxu0 0
    %334 = vmatpush1.bf16.msra.mxu0 %v311
    %335 = vmatprep.subr.bf16.mxu0 0
    %336 = vmatpush1.bf16.msra.mxu0 %v312
    %337 = vmatprep.subr.bf16.mxu0 0
    %338 = vmatpush1.bf16.msra.mxu0 0
    %339 = vmatprep.subr.bf16.mxu0 0
    %340 = vmatpush1.bf16.msra.mxu0 0
    %341 = vmatprep.subr.bf16.mxu0 0
    %342 = vmatpush1.bf16.msra.mxu0 0
    %343 = vmatprep.subr.bf16.mxu0 0
    %344 = vmatpush1.bf16.msra.mxu0 0
    %345 = vmatprep.subr.bf16.mxu0 0
    %346 = vmatpush1.bf16.msra.mxu0 0
    %347 = vmatprep.subr.bf16.mxu0 0
    %348 = vmatpush1.bf16.msra.mxu0 0
    %349 = vmatprep.subr.bf16.mxu0 0
    %350 = vmatpush1.bf16.msra.mxu0 0
    %351 = vmatprep.subr.bf16.mxu0 0
    %352 = vmatpush1.bf16.msra.mxu0 0
    %353 = vmatprep.mubr.bf16.mxu0 0
    %354 = vmatmul.mubr.bf16.gmra.mrb[0].mxu0 %v247
    %v355 = vpop.f32.mrb[0].mxu0
    %v356 = vadd.f32 %v271, %v355
    %v357 = vpop.f32.mrb[0].mxu0
    %v358 = vpop.f32.mrb[0].mxu0
    %v359 = vpop.f32.mrb[0].mxu0
    %360 = vdwg.mxu0
    %vm361 = vcmp.gt.f32.partialorder %v356, 0.0
    %v362 = vmul.f32 %v356, 1.442695
    %v363 = vpow.pop %v362
    %v364 = vsub.f32 %v363, 1.0
    %v365 = vsel %vm361, %v356, %v364
    %v366 = vpack.c.bf16 %v365, %v365
    %s367 = scalar_lea.vmem [#allocation2], 128
    %v368 = vld [vmem:[%s367] sm:$0xf]
    %v369 = vld [vmem:[%s367 + $0x4] sm:$0xf]
    %v370 = vld [vmem:[%s367 + $0x8] sm:$0xf]
    %v371 = vld [vmem:[%s367 + $0xc] sm:$0xf]
    %v372 = vld [vmem:[%s367 + $0x10] sm:$0xf]
    %v373 = vld [vmem:[%s367 + $0x14] sm:$0xf]
    %v374 = vld [vmem:[%s367 + $0x18] sm:$0xf]
    %v375 = vld [vmem:[%s367 + $0x1c] sm:$0xf]
    %v376 = vld [vmem:[%s367 + $0x20] sm:$0xf]
    %v377 = vld [vmem:[%s367 + $0x24] sm:$0xf]
    %v378 = vld [vmem:[%s367 + $0x28] sm:$0xf]
    %v379 = vld [vmem:[%s367 + $0x2c] sm:$0xf]
    %v380 = vld [vmem:[%s367 + $0x30] sm:$0xf]
    %v381 = vld [vmem:[%s367 + $0x34] sm:$0xf]
    %v382 = vld [vmem:[%s367 + $0x38] sm:$0xf]
    %v383 = vld [vmem:[%s367 + $0x3c] sm:$0xf]
    %s384 = scalar_lea.vmem %s4, 2
    %v385 = vld [vmem:[%s384] sm:$0x1]
    %v387 = vlaneseq
    %v388 = vshrl.u32 %v387, 7
    %v389 = vsub.s32 0, %v388
    %v390 = vrot.slane %v385, %v389
    %v408 = vunpack.c.l.b16 %v368
    %v409 = vunpack.c.l.b16 %v369
    %v410 = vunpack.c.l.b16 %v370
    %v411 = vunpack.c.l.b16 %v371
    %v412 = vunpack.c.l.b16 %v372
    %v413 = vunpack.c.l.b16 %v373
    %v414 = vunpack.c.l.b16 %v374
    %v415 = vunpack.c.l.b16 %v375
    %v416 = vunpack.c.l.b16 %v376
    %v417 = vunpack.c.l.b16 %v377
    %v418 = vunpack.c.l.b16 %v378
    %v419 = vunpack.c.l.b16 %v379
    %v420 = vunpack.c.l.b16 %v380
    %v421 = vunpack.c.l.b16 %v381
    %v422 = vunpack.c.l.b16 %v382
    %v423 = vunpack.c.l.b16 %v383
    %v424 = vpack.c.b16 %v409, %v408
    %v425 = vpack.c.b16 %v411, %v410
    %v426 = vpack.c.b16 %v413, %v412
    %v427 = vpack.c.b16 %v415, %v414
    %v428 = vpack.c.b16 %v417, %v416
    %v429 = vpack.c.b16 %v419, %v418
    %v430 = vpack.c.b16 %v421, %v420
    %v431 = vpack.c.b16 %v423, %v422
    %440 = vmatprep.subr.bf16.mxu0 0
    %441 = vmatpush1.bf16.msra.mxu0 %v424
    %442 = vmatprep.subr.bf16.mxu0 0
    %443 = vmatpush1.bf16.msra.mxu0 %v425
    %444 = vmatprep.subr.bf16.mxu0 0
    %445 = vmatpush1.bf16.msra.mxu0 %v426
    %446 = vmatprep.subr.bf16.mxu0 0
    %447 = vmatpush1.bf16.msra.mxu0 %v427
    %448 = vmatprep.subr.bf16.mxu0 0
    %449 = vmatpush1.bf16.msra.mxu0 %v428
    %450 = vmatprep.subr.bf16.mxu0 0
    %451 = vmatpush1.bf16.msra.mxu0 %v429
    %452 = vmatprep.subr.bf16.mxu0 0
    %453 = vmatpush1.bf16.msra.mxu0 %v430
    %454 = vmatprep.subr.bf16.mxu0 0
    %455 = vmatpush1.bf16.msra.mxu0 %v431
    %456 = vmatprep.subr.bf16.mxu0 0
    %457 = vmatpush1.bf16.msra.mxu0 0
    %458 = vmatprep.subr.bf16.mxu0 0
    %459 = vmatpush1.bf16.msra.mxu0 0
    %460 = vmatprep.subr.bf16.mxu0 0
    %461 = vmatpush1.bf16.msra.mxu0 0
    %462 = vmatprep.subr.bf16.mxu0 0
    %463 = vmatpush1.bf16.msra.mxu0 0
    %464 = vmatprep.subr.bf16.mxu0 0
    %465 = vmatpush1.bf16.msra.mxu0 0
    %466 = vmatprep.subr.bf16.mxu0 0
    %467 = vmatpush1.bf16.msra.mxu0 0
    %468 = vmatprep.subr.bf16.mxu0 0
    %469 = vmatpush1.bf16.msra.mxu0 0
    %470 = vmatprep.subr.bf16.mxu0 0
    %471 = vmatpush1.bf16.msra.mxu0 0
    %472 = vmatprep.mubr.bf16.mxu0 0
    %473 = vmatmul.mubr.bf16.gmra.mrb[0].mxu0 %v366
    %v474 = vpop.f32.mrb[0].mxu0
    %v475 = vadd.f32 %v390, %v474
    %v476 = vpop.f32.mrb[0].mxu0
    %v477 = vpop.f32.mrb[0].mxu0
    %v478 = vpop.f32.mrb[0].mxu0
    %479 = vdwg.mxu0
    %vm480 = vcmp.gt.f32.partialorder %v475, 0.0
    %v481 = vmul.f32 %v475, 1.442695
    %v482 = vpow.pop %v481
    %v483 = vsub.f32 %v482, 1.0
    %v484 = vsel %vm480, %v475, %v483
    %v485 = vpack.c.bf16 %v484, %v484
    %s486 = scalar_lea.vmem [#allocation2], 192
    %v487 = vld [vmem:[%s486] sm:$0xf]
    %v488 = vld [vmem:[%s486 + $0x4] sm:$0xf]
    %v489 = vld [vmem:[%s486 + $0x8] sm:$0xf]
    %v490 = vld [vmem:[%s486 + $0xc] sm:$0xf]
    %v491 = vld [vmem:[%s486 + $0x10] sm:$0xf]
    %v492 = vld [vmem:[%s486 + $0x14] sm:$0xf]
    %v493 = vld [vmem:[%s486 + $0x18] sm:$0xf]
    %v494 = vld [vmem:[%s486 + $0x1c] sm:$0xf]
    %v495 = vld [vmem:[%s486 + $0x20] sm:$0xf]
    %v496 = vld [vmem:[%s486 + $0x24] sm:$0xf]
    %v497 = vld [vmem:[%s486 + $0x28] sm:$0xf]
    %v498 = vld [vmem:[%s486 + $0x2c] sm:$0xf]
    %v499 = vld [vmem:[%s486 + $0x30] sm:$0xf]
    %v500 = vld [vmem:[%s486 + $0x34] sm:$0xf]
    %v501 = vld [vmem:[%s486 + $0x38] sm:$0xf]
    %v502 = vld [vmem:[%s486 + $0x3c] sm:$0xf]
    %s503 = scalar_lea.vmem %s4, 3
    %v504 = vld [vmem:[%s503] sm:$0x1]
    %v506 = vlaneseq
    %v507 = vshrl.u32 %v506, 7
    %v508 = vsub.s32 0, %v507
    %v509 = vrot.slane %v504, %v508
    %v527 = vunpack.c.l.b16 %v487
    %v528 = vunpack.c.l.b16 %v488
    %v529 = vunpack.c.l.b16 %v489
    %v530 = vunpack.c.l.b16 %v490
    %v531 = vunpack.c.l.b16 %v491
    %v532 = vunpack.c.l.b16 %v492
    %v533 = vunpack.c.l.b16 %v493
    %v534 = vunpack.c.l.b16 %v494
    %v535 = vunpack.c.l.b16 %v495
    %v536 = vunpack.c.l.b16 %v496
    %v537 = vunpack.c.l.b16 %v497
    %v538 = vunpack.c.l.b16 %v498
    %v539 = vunpack.c.l.b16 %v499
    %v540 = vunpack.c.l.b16 %v500
    %v541 = vunpack.c.l.b16 %v501
    %v542 = vunpack.c.l.b16 %v502
    %v543 = vpack.c.b16 %v528, %v527
    %v544 = vpack.c.b16 %v530, %v529
    %v545 = vpack.c.b16 %v532, %v531
    %v546 = vpack.c.b16 %v534, %v533
    %v547 = vpack.c.b16 %v536, %v535
    %v548 = vpack.c.b16 %v538, %v537
    %v549 = vpack.c.b16 %v540, %v539
    %v550 = vpack.c.b16 %v542, %v541
    %559 = vmatprep.subr.bf16.mxu0 0
    %560 = vmatpush1.bf16.msra.mxu0 %v543
    %561 = vmatprep.subr.bf16.mxu0 0
    %562 = vmatpush1.bf16.msra.mxu0 %v544
    %563 = vmatprep.subr.bf16.mxu0 0
    %564 = vmatpush1.bf16.msra.mxu0 %v545
    %565 = vmatprep.subr.bf16.mxu0 0
    %566 = vmatpush1.bf16.msra.mxu0 %v546
    %567 = vmatprep.subr.bf16.mxu0 0
    %568 = vmatpush1.bf16.msra.mxu0 %v547
    %569 = vmatprep.subr.bf16.mxu0 0
    %570 = vmatpush1.bf16.msra.mxu0 %v548
    %571 = vmatprep.subr.bf16.mxu0 0
    %572 = vmatpush1.bf16.msra.mxu0 %v549
    %573 = vmatprep.subr.bf16.mxu0 0
    %574 = vmatpush1.bf16.msra.mxu0 %v550
    %575 = vmatprep.subr.bf16.mxu0 0
    %576 = vmatpush1.bf16.msra.mxu0 0
    %577 = vmatprep.subr.bf16.mxu0 0
    %578 = vmatpush1.bf16.msra.mxu0 0
    %579 = vmatprep.subr.bf16.mxu0 0
    %580 = vmatpush1.bf16.msra.mxu0 0
    %581 = vmatprep.subr.bf16.mxu0 0
    %582 = vmatpush1.bf16.msra.mxu0 0
    %583 = vmatprep.subr.bf16.mxu0 0
    %584 = vmatpush1.bf16.msra.mxu0 0
    %585 = vmatprep.subr.bf16.mxu0 0
    %586 = vmatpush1.bf16.msra.mxu0 0
    %587 = vmatprep.subr.bf16.mxu0 0
    %588 = vmatpush1.bf16.msra.mxu0 0
    %589 = vmatprep.subr.bf16.mxu0 0
    %590 = vmatpush1.bf16.msra.mxu0 0
    %591 = vmatprep.mubr.bf16.mxu0 0
    %592 = vmatmul.mubr.bf16.gmra.mrb[0].mxu0 %v485
    %v593 = vpop.f32.mrb[0].mxu0
    %v594 = vadd.f32 %v509, %v593
    %v595 = vpop.f32.mrb[0].mxu0
    %v596 = vpop.f32.mrb[0].mxu0
    %v597 = vpop.f32.mrb[0].mxu0
    %598 = vdwg.mxu0
    %vm599 = vcmp.gt.f32.partialorder %v594, 0.0
    %v600 = vmul.f32 %v594, 1.442695
    %v601 = vpow.pop %v600
    %v602 = vsub.f32 %v601, 1.0
    %v603 = vsel %vm599, %v594, %v602
    %v604 = vpack.c.bf16 %v603, %v603
    %s605 = scalar_lea.vmem [#allocation2], 256
    %v606 = vld [vmem:[%s605] sm:$0xf]
    %v607 = vld [vmem:[%s605 + $0x4] sm:$0xf]
    %v608 = vld [vmem:[%s605 + $0x8] sm:$0xf]
    %v609 = vld [vmem:[%s605 + $0xc] sm:$0xf]
    %v610 = vld [vmem:[%s605 + $0x10] sm:$0xf]
    %v611 = vld [vmem:[%s605 + $0x14] sm:$0xf]
    %v612 = vld [vmem:[%s605 + $0x18] sm:$0xf]
    %v613 = vld [vmem:[%s605 + $0x1c] sm:$0xf]
    %v614 = vld [vmem:[%s605 + $0x20] sm:$0xf]
    %v615 = vld [vmem:[%s605 + $0x24] sm:$0xf]
    %v616 = vld [vmem:[%s605 + $0x28] sm:$0xf]
    %v617 = vld [vmem:[%s605 + $0x2c] sm:$0xf]
    %v618 = vld [vmem:[%s605 + $0x30] sm:$0xf]
    %v619 = vld [vmem:[%s605 + $0x34] sm:$0xf]
    %v620 = vld [vmem:[%s605 + $0x38] sm:$0xf]
    %v621 = vld [vmem:[%s605 + $0x3c] sm:$0xf]
    %s622 = scalar_lea.vmem %s4, 4
    %v623 = vld [vmem:[%s622] sm:$0x1]
    %v625 = vlaneseq
    %v626 = vshrl.u32 %v625, 7
    %v627 = vsub.s32 0, %v626
    %v628 = vrot.slane %v623, %v627
    %v646 = vunpack.c.l.b16 %v606
    %v647 = vunpack.c.l.b16 %v607
    %v648 = vunpack.c.l.b16 %v608
    %v649 = vunpack.c.l.b16 %v609
    %v650 = vunpack.c.l.b16 %v610
    %v651 = vunpack.c.l.b16 %v611
    %v652 = vunpack.c.l.b16 %v612
    %v653 = vunpack.c.l.b16 %v613
    %v654 = vunpack.c.l.b16 %v614
    %v655 = vunpack.c.l.b16 %v615
    %v656 = vunpack.c.l.b16 %v616
    %v657 = vunpack.c.l.b16 %v617
    %v658 = vunpack.c.l.b16 %v618
    %v659 = vunpack.c.l.b16 %v619
    %v660 = vunpack.c.l.b16 %v620
    %v661 = vunpack.c.l.b16 %v621
    %v662 = vpack.c.b16 %v647, %v646
    %v663 = vpack.c.b16 %v649, %v648
    %v664 = vpack.c.b16 %v651, %v650
    %v665 = vpack.c.b16 %v653, %v652
    %v666 = vpack.c.b16 %v655, %v654
    %v667 = vpack.c.b16 %v657, %v656
    %v668 = vpack.c.b16 %v659, %v658
    %v669 = vpack.c.b16 %v661, %v660
    %678 = vmatprep.subr.bf16.mxu0 0
    %679 = vmatpush1.bf16.msra.mxu0 %v662
    %680 = vmatprep.subr.bf16.mxu0 0
    %681 = vmatpush1.bf16.msra.mxu0 %v663
    %682 = vmatprep.subr.bf16.mxu0 0
    %683 = vmatpush1.bf16.msra.mxu0 %v664
    %684 = vmatprep.subr.bf16.mxu0 0
    %685 = vmatpush1.bf16.msra.mxu0 %v665
    %686 = vmatprep.subr.bf16.mxu0 0
    %687 = vmatpush1.bf16.msra.mxu0 %v666
    %688 = vmatprep.subr.bf16.mxu0 0
    %689 = vmatpush1.bf16.msra.mxu0 %v667
    %690 = vmatprep.subr.bf16.mxu0 0
    %691 = vmatpush1.bf16.msra.mxu0 %v668
    %692 = vmatprep.subr.bf16.mxu0 0
    %693 = vmatpush1.bf16.msra.mxu0 %v669
    %694 = vmatprep.subr.bf16.mxu0 0
    %695 = vmatpush1.bf16.msra.mxu0 0
    %696 = vmatprep.subr.bf16.mxu0 0
    %697 = vmatpush1.bf16.msra.mxu0 0
    %698 = vmatprep.subr.bf16.mxu0 0
    %699 = vmatpush1.bf16.msra.mxu0 0
    %700 = vmatprep.subr.bf16.mxu0 0
    %701 = vmatpush1.bf16.msra.mxu0 0
    %702 = vmatprep.subr.bf16.mxu0 0
    %703 = vmatpush1.bf16.msra.mxu0 0
    %704 = vmatprep.subr.bf16.mxu0 0
    %705 = vmatpush1.bf16.msra.mxu0 0
    %706 = vmatprep.subr.bf16.mxu0 0
    %707 = vmatpush1.bf16.msra.mxu0 0
    %708 = vmatprep.subr.bf16.mxu0 0
    %709 = vmatpush1.bf16.msra.mxu0 0
    %710 = vmatprep.mubr.bf16.mxu0 0
    %711 = vmatmul.mubr.bf16.gmra.mrb[0].mxu0 %v604
    %v712 = vpop.f32.mrb[0].mxu0
    %v713 = vadd.f32 %v628, %v712
    %v714 = vpop.f32.mrb[0].mxu0
    %v715 = vpop.f32.mrb[0].mxu0
    %v716 = vpop.f32.mrb[0].mxu0
    %717 = vdwg.mxu0
    %vm718 = vcmp.gt.f32.partialorder %v713, 0.0
    %v719 = vmul.f32 %v713, 1.442695
    %v720 = vpow.pop %v719
    %v721 = vsub.f32 %v720, 1.0
    %v722 = vsel %vm718, %v713, %v721
    %v723 = vpack.c.bf16 %v722, %v722
    %s724 = scalar_lea.vmem [#allocation2], 320
    %v725 = vld [vmem:[%s724] sm:$0xf]
    %v726 = vld [vmem:[%s724 + $0x4] sm:$0xf]
    %v727 = vld [vmem:[%s724 + $0x8] sm:$0xf]
    %v728 = vld [vmem:[%s724 + $0xc] sm:$0xf]
    %v729 = vld [vmem:[%s724 + $0x10] sm:$0xf]
    %v730 = vld [vmem:[%s724 + $0x14] sm:$0xf]
    %v731 = vld [vmem:[%s724 + $0x18] sm:$0xf]
    %v732 = vld [vmem:[%s724 + $0x1c] sm:$0xf]
    %v733 = vld [vmem:[%s724 + $0x20] sm:$0xf]
    %v734 = vld [vmem:[%s724 + $0x24] sm:$0xf]
    %v735 = vld [vmem:[%s724 + $0x28] sm:$0xf]
    %v736 = vld [vmem:[%s724 + $0x2c] sm:$0xf]
    %v737 = vld [vmem:[%s724 + $0x30] sm:$0xf]
    %v738 = vld [vmem:[%s724 + $0x34] sm:$0xf]
    %v739 = vld [vmem:[%s724 + $0x38] sm:$0xf]
    %v740 = vld [vmem:[%s724 + $0x3c] sm:$0xf]
    %s741 = scalar_lea.vmem %s4, 5
    %v742 = vld [vmem:[%s741] sm:$0x1]
    %v744 = vlaneseq
    %v745 = vshrl.u32 %v744, 7
    %v746 = vsub.s32 0, %v745
    %v747 = vrot.slane %v742, %v746
    %v765 = vunpack.c.l.b16 %v725
    %v766 = vunpack.c.l.b16 %v726
    %v767 = vunpack.c.l.b16 %v727
    %v768 = vunpack.c.l.b16 %v728
    %v769 = vunpack.c.l.b16 %v729
    %v770 = vunpack.c.l.b16 %v730
    %v771 = vunpack.c.l.b16 %v731
    %v772 = vunpack.c.l.b16 %v732
    %v773 = vunpack.c.l.b16 %v733
    %v774 = vunpack.c.l.b16 %v734
    %v775 = vunpack.c.l.b16 %v735
    %v776 = vunpack.c.l.b16 %v736
    %v777 = vunpack.c.l.b16 %v737
    %v778 = vunpack.c.l.b16 %v738
    %v779 = vunpack.c.l.b16 %v739
    %v780 = vunpack.c.l.b16 %v740
    %v781 = vpack.c.b16 %v766, %v765
    %v782 = vpack.c.b16 %v768, %v767
    %v783 = vpack.c.b16 %v770, %v769
    %v784 = vpack.c.b16 %v772, %v771
    %v785 = vpack.c.b16 %v774, %v773
    %v786 = vpack.c.b16 %v776, %v775
    %v787 = vpack.c.b16 %v778, %v777
    %v788 = vpack.c.b16 %v780, %v779
    %797 = vmatprep.subr.bf16.mxu0 0
    %798 = vmatpush1.bf16.msra.mxu0 %v781
    %799 = vmatprep.subr.bf16.mxu0 0
    %800 = vmatpush1.bf16.msra.mxu0 %v782
    %801 = vmatprep.subr.bf16.mxu0 0
    %802 = vmatpush1.bf16.msra.mxu0 %v783
    %803 = vmatprep.subr.bf16.mxu0 0
    %804 = vmatpush1.bf16.msra.mxu0 %v784
    %805 = vmatprep.subr.bf16.mxu0 0
    %806 = vmatpush1.bf16.msra.mxu0 %v785
    %807 = vmatprep.subr.bf16.mxu0 0
    %808 = vmatpush1.bf16.msra.mxu0 %v786
    %809 = vmatprep.subr.bf16.mxu0 0
    %810 = vmatpush1.bf16.msra.mxu0 %v787
    %811 = vmatprep.subr.bf16.mxu0 0
    %812 = vmatpush1.bf16.msra.mxu0 %v788
    %813 = vmatprep.subr.bf16.mxu0 0
    %814 = vmatpush1.bf16.msra.mxu0 0
    %815 = vmatprep.subr.bf16.mxu0 0
    %816 = vmatpush1.bf16.msra.mxu0 0
    %817 = vmatprep.subr.bf16.mxu0 0
    %818 = vmatpush1.bf16.msra.mxu0 0
    %819 = vmatprep.subr.bf16.mxu0 0
    %820 = vmatpush1.bf16.msra.mxu0 0
    %821 = vmatprep.subr.bf16.mxu0 0
    %822 = vmatpush1.bf16.msra.mxu0 0
    %823 = vmatprep.subr.bf16.mxu0 0
    %824 = vmatpush1.bf16.msra.mxu0 0
    %825 = vmatprep.subr.bf16.mxu0 0
    %826 = vmatpush1.bf16.msra.mxu0 0
    %827 = vmatprep.subr.bf16.mxu0 0
    %828 = vmatpush1.bf16.msra.mxu0 0
    %829 = vmatprep.mubr.bf16.mxu0 0
    %830 = vmatmul.mubr.bf16.gmra.mrb[0].mxu0 %v723
    %v831 = vpop.f32.mrb[0].mxu0
    %v832 = vadd.f32 %v747, %v831
    %v833 = vpop.f32.mrb[0].mxu0
    %v834 = vpop.f32.mrb[0].mxu0
    %v835 = vpop.f32.mrb[0].mxu0
    %836 = vdwg.mxu0
    %vm837 = vcmp.gt.f32.partialorder %v832, 0.0
    %v838 = vmul.f32 %v832, 1.442695
    %v839 = vpow.pop %v838
    %v840 = vsub.f32 %v839, 1.0
    %v841 = vsel %vm837, %v832, %v840
    %v842 = vpack.c.bf16 %v841, %v841
    %s843 = scalar_lea.vmem [#allocation2], 384
    %v844 = vld [vmem:[%s843] sm:$0xf]
    %v845 = vld [vmem:[%s843 + $0x4] sm:$0xf]
    %v846 = vld [vmem:[%s843 + $0x8] sm:$0xf]
    %v847 = vld [vmem:[%s843 + $0xc] sm:$0xf]
    %v848 = vld [vmem:[%s843 + $0x10] sm:$0xf]
    %v849 = vld [vmem:[%s843 + $0x14] sm:$0xf]
    %v850 = vld [vmem:[%s843 + $0x18] sm:$0xf]
    %v851 = vld [vmem:[%s843 + $0x1c] sm:$0xf]
    %v852 = vld [vmem:[%s843 + $0x20] sm:$0xf]
    %v853 = vld [vmem:[%s843 + $0x24] sm:$0xf]
    %v854 = vld [vmem:[%s843 + $0x28] sm:$0xf]
    %v855 = vld [vmem:[%s843 + $0x2c] sm:$0xf]
    %v856 = vld [vmem:[%s843 + $0x30] sm:$0xf]
    %v857 = vld [vmem:[%s843 + $0x34] sm:$0xf]
    %v858 = vld [vmem:[%s843 + $0x38] sm:$0xf]
    %v859 = vld [vmem:[%s843 + $0x3c] sm:$0xf]
    %s860 = scalar_lea.vmem %s4, 6
    %v861 = vld [vmem:[%s860] sm:$0x1]
    %v863 = vlaneseq
    %v864 = vshrl.u32 %v863, 7
    %v865 = vsub.s32 0, %v864
    %v866 = vrot.slane %v861, %v865
    %v884 = vunpack.c.l.b16 %v844
    %v885 = vunpack.c.l.b16 %v845
    %v886 = vunpack.c.l.b16 %v846
    %v887 = vunpack.c.l.b16 %v847
    %v888 = vunpack.c.l.b16 %v848
    %v889 = vunpack.c.l.b16 %v849
    %v890 = vunpack.c.l.b16 %v850
    %v891 = vunpack.c.l.b16 %v851
    %v892 = vunpack.c.l.b16 %v852
    %v893 = vunpack.c.l.b16 %v853
    %v894 = vunpack.c.l.b16 %v854
    %v895 = vunpack.c.l.b16 %v855
    %v896 = vunpack.c.l.b16 %v856
    %v897 = vunpack.c.l.b16 %v857
    %v898 = vunpack.c.l.b16 %v858
    %v899 = vunpack.c.l.b16 %v859
    %v900 = vpack.c.b16 %v885, %v884
    %v901 = vpack.c.b16 %v887, %v886
    %v902 = vpack.c.b16 %v889, %v888
    %v903 = vpack.c.b16 %v891, %v890
    %v904 = vpack.c.b16 %v893, %v892
    %v905 = vpack.c.b16 %v895, %v894
    %v906 = vpack.c.b16 %v897, %v896
    %v907 = vpack.c.b16 %v899, %v898
    %916 = vmatprep.subr.bf16.mxu0 0
    %917 = vmatpush1.bf16.msra.mxu0 %v900
    %918 = vmatprep.subr.bf16.mxu0 0
    %919 = vmatpush1.bf16.msra.mxu0 %v901
    %920 = vmatprep.subr.bf16.mxu0 0
    %921 = vmatpush1.bf16.msra.mxu0 %v902
    %922 = vmatprep.subr.bf16.mxu0 0
    %923 = vmatpush1.bf16.msra.mxu0 %v903
    %924 = vmatprep.subr.bf16.mxu0 0
    %925 = vmatpush1.bf16.msra.mxu0 %v904
    %926 = vmatprep.subr.bf16.mxu0 0
    %927 = vmatpush1.bf16.msra.mxu0 %v905
    %928 = vmatprep.subr.bf16.mxu0 0
    %929 = vmatpush1.bf16.msra.mxu0 %v906
    %930 = vmatprep.subr.bf16.mxu0 0
    %931 = vmatpush1.bf16.msra.mxu0 %v907
    %932 = vmatprep.subr.bf16.mxu0 0
    %933 = vmatpush1.bf16.msra.mxu0 0
    %934 = vmatprep.subr.bf16.mxu0 0
    %935 = vmatpush1.bf16.msra.mxu0 0
    %936 = vmatprep.subr.bf16.mxu0 0
    %937 = vmatpush1.bf16.msra.mxu0 0
    %938 = vmatprep.subr.bf16.mxu0 0
    %939 = vmatpush1.bf16.msra.mxu0 0
    %940 = vmatprep.subr.bf16.mxu0 0
    %941 = vmatpush1.bf16.msra.mxu0 0
    %942 = vmatprep.subr.bf16.mxu0 0
    %943 = vmatpush1.bf16.msra.mxu0 0
    %944 = vmatprep.subr.bf16.mxu0 0
    %945 = vmatpush1.bf16.msra.mxu0 0
    %946 = vmatprep.subr.bf16.mxu0 0
    %947 = vmatpush1.bf16.msra.mxu0 0
    %948 = vmatprep.mubr.bf16.mxu0 0
    %949 = vmatmul.mubr.bf16.gmra.mrb[0].mxu0 %v842
    %v950 = vpop.f32.mrb[0].mxu0
    %v951 = vadd.f32 %v866, %v950
    %v952 = vpop.f32.mrb[0].mxu0
    %v953 = vpop.f32.mrb[0].mxu0
    %v954 = vpop.f32.mrb[0].mxu0
    %955 = vdwg.mxu0
    %vm956 = vcmp.gt.f32.partialorder %v951, 0.0
    %v957 = vmul.f32 %v951, 1.442695
    %v958 = vpow.pop %v957
    %v959 = vsub.f32 %v958, 1.0
    %v960 = vsel %vm956, %v951, %v959
    %v961 = vpack.c.bf16 %v960, %v960
    %s962 = scalar_lea.vmem [#allocation2], 448
    %v963 = vld [vmem:[%s962] sm:$0xf]
    %v964 = vld [vmem:[%s962 + $0x4] sm:$0xf]
    %v965 = vld [vmem:[%s962 + $0x8] sm:$0xf]
    %v966 = vld [vmem:[%s962 + $0xc] sm:$0xf]
    %v967 = vld [vmem:[%s962 + $0x10] sm:$0xf]
    %v968 = vld [vmem:[%s962 + $0x14] sm:$0xf]
    %v969 = vld [vmem:[%s962 + $0x18] sm:$0xf]
    %v970 = vld [vmem:[%s962 + $0x1c] sm:$0xf]
    %v971 = vld [vmem:[%s962 + $0x20] sm:$0xf]
    %v972 = vld [vmem:[%s962 + $0x24] sm:$0xf]
    %v973 = vld [vmem:[%s962 + $0x28] sm:$0xf]
    %v974 = vld [vmem:[%s962 + $0x2c] sm:$0xf]
    %v975 = vld [vmem:[%s962 + $0x30] sm:$0xf]
    %v976 = vld [vmem:[%s962 + $0x34] sm:$0xf]
    %v977 = vld [vmem:[%s962 + $0x38] sm:$0xf]
    %v978 = vld [vmem:[%s962 + $0x3c] sm:$0xf]
    %s979 = scalar_lea.vmem %s4, 7
    %v980 = vld [vmem:[%s979] sm:$0x1]
    %v982 = vlaneseq
    %v983 = vshrl.u32 %v982, 7
    %v984 = vsub.s32 0, %v983
    %v985 = vrot.slane %v980, %v984
    %v1003 = vunpack.c.l.b16 %v963
    %v1004 = vunpack.c.l.b16 %v964
    %v1005 = vunpack.c.l.b16 %v965
    %v1006 = vunpack.c.l.b16 %v966
    %v1007 = vunpack.c.l.b16 %v967
    %v1008 = vunpack.c.l.b16 %v968
    %v1009 = vunpack.c.l.b16 %v969
    %v1010 = vunpack.c.l.b16 %v970
    %v1011 = vunpack.c.l.b16 %v971
    %v1012 = vunpack.c.l.b16 %v972
    %v1013 = vunpack.c.l.b16 %v973
    %v1014 = vunpack.c.l.b16 %v974
    %v1015 = vunpack.c.l.b16 %v975
    %v1016 = vunpack.c.l.b16 %v976
    %v1017 = vunpack.c.l.b16 %v977
    %v1018 = vunpack.c.l.b16 %v978
    %v1019 = vpack.c.b16 %v1004, %v1003
    %v1020 = vpack.c.b16 %v1006, %v1005
    %v1021 = vpack.c.b16 %v1008, %v1007
    %v1022 = vpack.c.b16 %v1010, %v1009
    %v1023 = vpack.c.b16 %v1012, %v1011
    %v1024 = vpack.c.b16 %v1014, %v1013
    %v1025 = vpack.c.b16 %v1016, %v1015
    %v1026 = vpack.c.b16 %v1018, %v1017
    %1035 = vmatprep.subr.bf16.mxu0 0
    %1036 = vmatpush1.bf16.msra.mxu0 %v1019
    %1037 = vmatprep.subr.bf16.mxu0 0
    %1038 = vmatpush1.bf16.msra.mxu0 %v1020
    %1039 = vmatprep.subr.bf16.mxu0 0
    %1040 = vmatpush1.bf16.msra.mxu0 %v1021
    %1041 = vmatprep.subr.bf16.mxu0 0
    %1042 = vmatpush1.bf16.msra.mxu0 %v1022
    %1043 = vmatprep.subr.bf16.mxu0 0
    %1044 = vmatpush1.bf16.msra.mxu0 %v1023
    %1045 = vmatprep.subr.bf16.mxu0 0
    %1046 = vmatpush1.bf16.msra.mxu0 %v1024
    %1047 = vmatprep.subr.bf16.mxu0 0
    %1048 = vmatpush1.bf16.msra.mxu0 %v1025
    %1049 = vmatprep.subr.bf16.mxu0 0
    %1050 = vmatpush1.bf16.msra.mxu0 %v1026
    %1051 = vmatprep.subr.bf16.mxu0 0
    %1052 = vmatpush1.bf16.msra.mxu0 0
    %1053 = vmatprep.subr.bf16.mxu0 0
    %1054 = vmatpush1.bf16.msra.mxu0 0
    %1055 = vmatprep.subr.bf16.mxu0 0
    %1056 = vmatpush1.bf16.msra.mxu0 0
    %1057 = vmatprep.subr.bf16.mxu0 0
    %1058 = vmatpush1.bf16.msra.mxu0 0
    %1059 = vmatprep.subr.bf16.mxu0 0
    %1060 = vmatpush1.bf16.msra.mxu0 0
    %1061 = vmatprep.subr.bf16.mxu0 0
    %1062 = vmatpush1.bf16.msra.mxu0 0
    %1063 = vmatprep.subr.bf16.mxu0 0
    %1064 = vmatpush1.bf16.msra.mxu0 0
    %1065 = vmatprep.subr.bf16.mxu0 0
    %1066 = vmatpush1.bf16.msra.mxu0 0
    %1067 = vmatprep.mubr.bf16.mxu0 0
    %1068 = vmatmul.mubr.bf16.gmra.mrb[0].mxu0 %v961
    %v1069 = vpop.f32.mrb[0].mxu0
    %v1070 = vadd.f32 %v985, %v1069
    %v1071 = vpop.f32.mrb[0].mxu0
    %v1072 = vpop.f32.mrb[0].mxu0
    %v1073 = vpop.f32.mrb[0].mxu0
    %1074 = vdwg.mxu0
    %vm1075 = vcmp.gt.f32.partialorder %v1070, 0.0
    %v1076 = vmul.f32 %v1070, 1.442695
    %v1077 = vpow.pop %v1076
    %v1078 = vsub.f32 %v1077, 1.0
    %v1079 = vsel %vm1075, %v1070, %v1078
    %v1080 = vpack.c.bf16 %v1079, %v1079
    %s1081 = scalar_lea.vmem [#allocation2], 512
    %v1082 = vld [vmem:[%s1081] sm:$0xf]
    %v1083 = vld [vmem:[%s1081 + $0x4] sm:$0xf]
    %v1084 = vld [vmem:[%s1081 + $0x8] sm:$0xf]
    %v1085 = vld [vmem:[%s1081 + $0xc] sm:$0xf]
    %v1086 = vld [vmem:[%s1081 + $0x10] sm:$0xf]
    %v1087 = vld [vmem:[%s1081 + $0x14] sm:$0xf]
    %v1088 = vld [vmem:[%s1081 + $0x18] sm:$0xf]
    %v1089 = vld [vmem:[%s1081 + $0x1c] sm:$0xf]
    %v1090 = vld [vmem:[%s1081 + $0x20] sm:$0xf]
    %v1091 = vld [vmem:[%s1081 + $0x24] sm:$0xf]
    %v1092 = vld [vmem:[%s1081 + $0x28] sm:$0xf]
    %v1093 = vld [vmem:[%s1081 + $0x2c] sm:$0xf]
    %v1094 = vld [vmem:[%s1081 + $0x30] sm:$0xf]
    %v1095 = vld [vmem:[%s1081 + $0x34] sm:$0xf]
    %v1096 = vld [vmem:[%s1081 + $0x38] sm:$0xf]
    %v1097 = vld [vmem:[%s1081 + $0x3c] sm:$0xf]
    %s1098 = scalar_lea.vmem %s4, 8
    %v1099 = vld [vmem:[%s1098] sm:$0x1]
    %v1101 = vlaneseq
    %v1102 = vshrl.u32 %v1101, 7
    %v1103 = vsub.s32 0, %v1102
    %v1104 = vrot.slane %v1099, %v1103
    %v1122 = vunpack.c.l.b16 %v1082
    %v1123 = vunpack.c.l.b16 %v1083
    %v1124 = vunpack.c.l.b16 %v1084
    %v1125 = vunpack.c.l.b16 %v1085
    %v1126 = vunpack.c.l.b16 %v1086
    %v1127 = vunpack.c.l.b16 %v1087
    %v1128 = vunpack.c.l.b16 %v1088
    %v1129 = vunpack.c.l.b16 %v1089
    %v1130 = vunpack.c.l.b16 %v1090
    %v1131 = vunpack.c.l.b16 %v1091
    %v1132 = vunpack.c.l.b16 %v1092
    %v1133 = vunpack.c.l.b16 %v1093
    %v1134 = vunpack.c.l.b16 %v1094
    %v1135 = vunpack.c.l.b16 %v1095
    %v1136 = vunpack.c.l.b16 %v1096
    %v1137 = vunpack.c.l.b16 %v1097
    %v1138 = vpack.c.b16 %v1123, %v1122
    %v1139 = vpack.c.b16 %v1125, %v1124
    %v1140 = vpack.c.b16 %v1127, %v1126
    %v1141 = vpack.c.b16 %v1129, %v1128
    %v1142 = vpack.c.b16 %v1131, %v1130
    %v1143 = vpack.c.b16 %v1133, %v1132
    %v1144 = vpack.c.b16 %v1135, %v1134
    %v1145 = vpack.c.b16 %v1137, %v1136
    %1154 = vmatprep.subr.bf16.mxu0 0
    %1155 = vmatpush1.bf16.msra.mxu0 %v1138
    %1156 = vmatprep.subr.bf16.mxu0 0
    %1157 = vmatpush1.bf16.msra.mxu0 %v1139
    %1158 = vmatprep.subr.bf16.mxu0 0
    %1159 = vmatpush1.bf16.msra.mxu0 %v1140
    %1160 = vmatprep.subr.bf16.mxu0 0
    %1161 = vmatpush1.bf16.msra.mxu0 %v1141
    %1162 = vmatprep.subr.bf16.mxu0 0
    %1163 = vmatpush1.bf16.msra.mxu0 %v1142
    %1164 = vmatprep.subr.bf16.mxu0 0
    %1165 = vmatpush1.bf16.msra.mxu0 %v1143
    %1166 = vmatprep.subr.bf16.mxu0 0
    %1167 = vmatpush1.bf16.msra.mxu0 %v1144
    %1168 = vmatprep.subr.bf16.mxu0 0
    %1169 = vmatpush1.bf16.msra.mxu0 %v1145
    %1170 = vmatprep.subr.bf16.mxu0 0
    %1171 = vmatpush1.bf16.msra.mxu0 0
    %1172 = vmatprep.subr.bf16.mxu0 0
    %1173 = vmatpush1.bf16.msra.mxu0 0
    %1174 = vmatprep.subr.bf16.mxu0 0
    %1175 = vmatpush1.bf16.msra.mxu0 0
    %1176 = vmatprep.subr.bf16.mxu0 0
    %1177 = vmatpush1.bf16.msra.mxu0 0
    %1178 = vmatprep.subr.bf16.mxu0 0
    %1179 = vmatpush1.bf16.msra.mxu0 0
    %1180 = vmatprep.subr.bf16.mxu0 0
    %1181 = vmatpush1.bf16.msra.mxu0 0
    %1182 = vmatprep.subr.bf16.mxu0 0
    %1183 = vmatpush1.bf16.msra.mxu0 0
    %1184 = vmatprep.subr.bf16.mxu0 0
    %1185 = vmatpush1.bf16.msra.mxu0 0
    %1186 = vmatprep.mubr.bf16.mxu0 0
    %1187 = vmatmul.mubr.bf16.gmra.mrb[0].mxu0 %v1080
    %v1188 = vpop.f32.mrb[0].mxu0
    %v1189 = vadd.f32 %v1104, %v1188
    %v1190 = vpop.f32.mrb[0].mxu0
    %v1191 = vpop.f32.mrb[0].mxu0
    %v1192 = vpop.f32.mrb[0].mxu0
    %1193 = vdwg.mxu0
    %vm1194 = vcmp.gt.f32.partialorder %v1189, 0.0
    %v1195 = vmul.f32 %v1189, 1.442695
    %v1196 = vpow.pop %v1195
    %v1197 = vsub.f32 %v1196, 1.0
    %v1198 = vsel %vm1194, %v1189, %v1197
    %v1199 = vpack.c.bf16 %v1198, %v1198
    %v1200 = vld [vmem:[%s5] sm:$0xf]
    %v1201 = vld [vmem:[%s5 + $0x4] sm:$0xf]
    %v1202 = vld [vmem:[%s5 + $0x8] sm:$0xf]
    %v1203 = vld [vmem:[%s5 + $0xc] sm:$0xf]
    %v1204 = vld [vmem:[%s5 + $0x10] sm:$0xf]
    %v1205 = vld [vmem:[%s5 + $0x14] sm:$0xf]
    %v1206 = vld [vmem:[%s5 + $0x18] sm:$0xf]
    %v1207 = vld [vmem:[%s5 + $0x1c] sm:$0xf]
    %v1208 = vld [vmem:[%s5 + $0x20] sm:$0xf]
    %v1209 = vld [vmem:[%s5 + $0x24] sm:$0xf]
    %v1210 = vld [vmem:[%s5 + $0x28] sm:$0xf]
    %v1211 = vld [vmem:[%s5 + $0x2c] sm:$0xf]
    %v1212 = vld [vmem:[%s5 + $0x30] sm:$0xf]
    %v1213 = vld [vmem:[%s5 + $0x34] sm:$0xf]
    %v1214 = vld [vmem:[%s5 + $0x38] sm:$0xf]
    %v1215 = vld [vmem:[%s5 + $0x3c] sm:$0xf]
    %v1216 = vld [vmem:[%s6] sm:$0x1]
    %v1218 = vlaneseq
    %v1219 = vshrl.u32 %v1218, 7
    %v1220 = vsub.s32 0, %v1219
    %v1221 = vrot.slane %v1216, %v1220
    %v1239 = vunpack.c.l.b16 %v1200
    %v1240 = vunpack.c.l.b16 %v1201
    %v1241 = vunpack.c.l.b16 %v1202
    %v1242 = vunpack.c.l.b16 %v1203
    %v1243 = vunpack.c.l.b16 %v1204
    %v1244 = vunpack.c.l.b16 %v1205
    %v1245 = vunpack.c.l.b16 %v1206
    %v1246 = vunpack.c.l.b16 %v1207
    %v1247 = vunpack.c.l.b16 %v1208
    %v1248 = vunpack.c.l.b16 %v1209
    %v1249 = vunpack.c.l.b16 %v1210
    %v1250 = vunpack.c.l.b16 %v1211
    %v1251 = vunpack.c.l.b16 %v1212
    %v1252 = vunpack.c.l.b16 %v1213
    %v1253 = vunpack.c.l.b16 %v1214
    %v1254 = vunpack.c.l.b16 %v1215
    %v1255 = vpack.c.b16 %v1240, %v1239
    %v1256 = vpack.c.b16 %v1242, %v1241
    %v1257 = vpack.c.b16 %v1244, %v1243
    %v1258 = vpack.c.b16 %v1246, %v1245
    %v1259 = vpack.c.b16 %v1248, %v1247
    %v1260 = vpack.c.b16 %v1250, %v1249
    %v1261 = vpack.c.b16 %v1252, %v1251
    %v1262 = vpack.c.b16 %v1254, %v1253
    %1271 = vmatprep.subr.bf16.mxu0 0
    %1272 = vmatpush1.bf16.msra.mxu0 %v1255
    %1273 = vmatprep.subr.bf16.mxu0 0
    %1274 = vmatpush1.bf16.msra.mxu0 %v1256
    %1275 = vmatprep.subr.bf16.mxu0 0
    %1276 = vmatpush1.bf16.msra.mxu0 %v1257
    %1277 = vmatprep.subr.bf16.mxu0 0
    %1278 = vmatpush1.bf16.msra.mxu0 %v1258
    %1279 = vmatprep.subr.bf16.mxu0 0
    %1280 = vmatpush1.bf16.msra.mxu0 %v1259
    %1281 = vmatprep.subr.bf16.mxu0 0
    %1282 = vmatpush1.bf16.msra.mxu0 %v1260
    %1283 = vmatprep.subr.bf16.mxu0 0
    %1284 = vmatpush1.bf16.msra.mxu0 %v1261
    %1285 = vmatprep.subr.bf16.mxu0 0
    %1286 = vmatpush1.bf16.msra.mxu0 %v1262
    %1287 = vmatprep.subr.bf16.mxu0 0
    %1288 = vmatpush1.bf16.msra.mxu0 0
    %1289 = vmatprep.subr.bf16.mxu0 0
    %1290 = vmatpush1.bf16.msra.mxu0 0
    %1291 = vmatprep.subr.bf16.mxu0 0
    %1292 = vmatpush1.bf16.msra.mxu0 0
    %1293 = vmatprep.subr.bf16.mxu0 0
    %1294 = vmatpush1.bf16.msra.mxu0 0
    %1295 = vmatprep.subr.bf16.mxu0 0
    %1296 = vmatpush1.bf16.msra.mxu0 0
    %1297 = vmatprep.subr.bf16.mxu0 0
    %1298 = vmatpush1.bf16.msra.mxu0 0
    %1299 = vmatprep.subr.bf16.mxu0 0
    %1300 = vmatpush1.bf16.msra.mxu0 0
    %1301 = vmatprep.subr.bf16.mxu0 0
    %1302 = vmatpush1.bf16.msra.mxu0 0
    %1303 = vmatprep.mubr.bf16.mxu0 0
    %1304 = vmatmul.mubr.bf16.gmra.mrb[0].mxu0 %v1199
    %v1305 = vpop.f32.mrb[0].mxu0
    %v1306 = vadd.f32 %v1221, %v1305
    %v1307 = vpop.f32.mrb[0].mxu0
    %v1308 = vpop.f32.mrb[0].mxu0
    %v1309 = vpop.f32.mrb[0].mxu0
    %1310 = vdwg.mxu0
    %vm1311 = vcmask 15360
    %1312 = vst.msk [vmem:[%s7] sm:$0xff] %vm1311, %v1306
    // Predicated region
    $region34: #{tpu_custom_call.1} parent=1 // pred_check
      _
    $region35: #{tpu_custom_call.1} parent=1 // pred_check_branch
      %1314 = sbr.rel (0) target = $region37
    $region36: #{tpu_custom_call.1} parent=1 // pred_region
      _
    $region37: #{tpu_custom_call.1} parent=1 // pred_fallthru
      _
    // Predicated region
    $region38: #{tpu_custom_call.1} parent=1 // pred_check
      _
    $region39: #{tpu_custom_call.1} parent=1 // pred_check_branch
      %1316 = sbr.rel (0) target = $region41
    $region40: #{tpu_custom_call.1} parent=1 // pred_region
      _
    $region41: #{tpu_custom_call.1} parent=1 // pred_fallthru
      _
    %1317 = vsyncpa [#allocation3], 1

</llo_original>
